<compile_context>
chip_gen: v6e
topology: v6e:2x2x1
jax: 0.10.0
libtpu: 0.0.40
codegen_flags: <defaults>
</compile_context>

<pallas_src>
import functools

import jax
import jax.numpy as jnp
from jax.experimental import pallas as pl
from jax.experimental.pallas import tpu as pltpu


_LANE = 128
_MAX_BATCH_PER_BLOCK = 8  # bounds the static per-page unroll inside the kernel


def _sw_v2_kernel(x_ref, w_ref, o_ref):
    # x_ref: (bn, C, T) block of x, native dtype.  C on sublanes, T lane-dense.
    # w_ref: (C, 1) f32 folded per-channel weight: sum_ci wv[ci, c]
    # o_ref: (bn, C, T)
    w = w_ref[...]                                     # (C, 1) f32
    bn = x_ref.shape[0]
    # Static unroll over the (small, <= _MAX_BATCH_PER_BLOCK) batch pages; each
    # page is a fully vectorised (C, T) multiply-reduce on the VPU/XLU.
    for b in range(bn):
        xf = x_ref[b].astype(jnp.float32)              # (C, T)
        # y[t] = sigmoid( sum_c w[c] * x[c, t] )  -- sublane reduce, lane-wise
        y = jax.nn.sigmoid(jnp.sum(xf * w, axis=0, keepdims=True))   # (1, T) f32
        o_ref[b] = (xf * y).astype(o_ref.dtype)        # broadcast over channels


def _choose_tiling(N, C, HW, itemsize, target_block_bytes):
    """Pick (bn, tile_hw) so each block carries ~target_block_bytes of x."""
    per_pos = C * itemsize          # bytes for one spatial position (all channels)
    per_batch = per_pos * HW        # bytes for one batch element
    if per_batch <= target_block_bytes:
        # Whole spatial extent fits in one block; pack batch elements instead
        # (important for early LiteHRNet stages with small H*W).
        tile_hw = HW                # full extent -> no (8,128) constraint issue
        bn = max(1, min(N, _MAX_BATCH_PER_BLOCK, target_block_bytes // per_batch))
    else:
        bn = 1
        # Lane-aligned spatial tile close to the byte target; ragged tail is
        # handled by cdiv + Pallas masking, so no divisibility requirement.
        tile_hw = max(_LANE, (target_block_bytes // per_pos) // _LANE * _LANE)
        tile_hw = min(tile_hw, HW)
    return bn, tile_hw


@functools.partial(jax.jit, static_argnames=("target_block_bytes", "min_pallas_bytes"))
def spatial_weighting_v2(x_nchw, w_v, w_q, *, target_block_bytes=4 * 1024 * 1024,
                         min_pallas_bytes=256 * 1024):
    """x_nchw: (N, C, H, W); w_v, w_q: (Ci, C, 1, 1) PyTorch 1x1 conv weights.

    w_q is accepted for interface parity but is mathematically dead (softmax
    over a size-1 dim is exactly 1.0), so the q branch contributes nothing.
    """
    del w_q  # dead branch: softmax over size-1 axis == 1.0 exactly
    N, C, H, W = x_nchw.shape
    HW = H * W
    itemsize = jnp.dtype(x_nchw.dtype).itemsize

    # Fold the Ci-sum (q == 1) into the 1x1 conv weights -> per-channel scalar.
    wsum = jnp.sum(w_v[:, :, 0, 0].astype(jnp.float32), axis=0)      # (C,)

    # Tiny activations: pallas_call fixed overhead dominates; let XLA fuse it.
    if N * C * HW * itemsize < min_pallas_bytes:
        y = jax.nn.sigmoid(jnp.einsum('c,nchw->nhw', wsum,
                                      x_nchw.astype(jnp.float32)))
        return (x_nchw.astype(jnp.float32) * y[:, None, :, :]).astype(x_nchw.dtype)

    # Free reshape (no transpose): channels-first, spatial on the lane axis.
    x_flat = x_nchw.reshape(N, C, HW)
    wsum_col = wsum.reshape(C, 1)

    bn, tile_hw = _choose_tiling(N, C, HW, itemsize, target_block_bytes)
    grid = (pl.cdiv(N, bn), pl.cdiv(HW, tile_hw))
    block_bytes = bn * C * tile_hw * itemsize

    # Double-buffered in + out ~= 4x block; cap below v7x's 64 MiB physical VMEM.
    vmem_limit = int(min(64 * 1024 * 1024,
                         max(32 * 1024 * 1024, 5 * block_bytes)))

    cost = pl.CostEstimate(
        flops=3 * N * C * HW,                 # mul+add reduce, plus the x*y scale
        transcendentals=N * HW,               # sigmoid
        bytes_accessed=2 * N * C * HW * itemsize,
    )

    out_flat = pl.pallas_call(
        _sw_v2_kernel,
        out_shape=jax.ShapeDtypeStruct((N, C, HW), x_nchw.dtype),
        grid_spec=pltpu.PrefetchScalarGridSpec(
            num_scalar_prefetch=0,
            grid=grid,
            in_specs=[
                pl.BlockSpec((bn, C, tile_hw), lambda b, t: (b, 0, t)),
                pl.BlockSpec((C, 1), lambda b, t: (0, 0)),
            ],
            out_specs=pl.BlockSpec((bn, C, tile_hw), lambda b, t: (b, 0, t)),
        ),
        compiler_params=pltpu.CompilerParams(
            dimension_semantics=("parallel", "parallel"),
            vmem_limit_bytes=vmem_limit,
        ),
        cost_estimate=cost,
    )(x_flat, wsum_col)

    return out_flat.reshape(N, C, H, W)


def _reference(x, w_v, w_q):
    """Pure-JAX transcription of the PyTorch forward (f32 math)."""
    N, C, H, W = x.shape
    Ci = w_v.shape[0]
    HW = H * W
    wv = w_v[:, :, 0, 0].astype(jnp.float32)      # (Ci, C)
    wq = w_q[:, :, 0, 0].astype(jnp.float32)      # (Ci, C)
    xf = x.astype(jnp.float32)
    v = jnp.einsum('oc,nchw->nohw', wv, xf).reshape(N, Ci, HW)       # (N, Ci, HW)
    q = jnp.einsum('oc,nchw->nohw', wq, xf).reshape(N * Ci, HW, 1)
    q = jnp.mean(q, axis=1, keepdims=True)                           # (N*Ci, 1, 1)
    q = jax.nn.softmax(q, axis=1)                                    # all ones
    q = q.reshape(N, 1, Ci)
    y = jnp.matmul(q, v).reshape(N, 1, H, W)
    y = jax.nn.sigmoid(y)
    return xf * y


if __name__ == "__main__":
    key = jax.random.PRNGKey(0)

    # (name, shape, dtype, kernel kwargs)
    cases = [
        # Batch-packed single spatial block: bn=2, tile_hw=HW, grid (1,1).
        ("packed_batch_f32", (2, 32, 64, 64), jnp.float32, {}),
        # Multi-step spatial tiling: tile_hw=1024, grid (2,4).
        ("multi_tile_f32", (2, 32, 64, 64), jnp.float32,
         {"target_block_bytes": 128 * 1024}),
        # Ragged spatial extent (HW=1155): cdiv grid with masked last block.
        ("ragged_f32", (2, 32, 33, 35), jnp.float32,
         {"target_block_bytes": 64 * 1024}),
        # bf16 input, f32 accumulate inside the kernel.
        ("bf16", (2, 32, 64, 64), jnp.bfloat16, {}),
        # Tiny activation -> fused-XLA fallback path (no pallas_call).
        ("tiny_fallback", (2, 32, 16, 16), jnp.float32, {}),
    ]

    for idx, (name, (N, C, H, W), dtype, kw) in enumerate(cases):
        Ci = max(1, C // 16)   # ratio=16 -> internal_channels
        k = jax.random.fold_in(key, idx)
        kx, kv, kq = jax.random.split(k, 3)
        x = jax.random.normal(kx, (N, C, H, W), dtype=jnp.float32).astype(dtype)
        w_v = jax.random.normal(kv, (Ci, C, 1, 1), dtype=jnp.float32) * 0.1
        w_q = jax.random.normal(kq, (Ci, C, 1, 1), dtype=jnp.float32) * 0.1

        out = jax.block_until_ready(spatial_weighting_v2(x, w_v, w_q, **kw))
        ref = _reference(x, w_v, w_q)

        assert out.shape == (N, C, H, W), f"{name}: bad shape {out.shape}"
        assert out.dtype == dtype, f"{name}: bad dtype {out.dtype}"
        tol = 3e-2 if dtype == jnp.bfloat16 else 1e-5
        assert jnp.allclose(out.astype(jnp.float32), ref, atol=tol, rtol=tol), \
            f"mismatch vs reference: {name}"

    print("KERNEL_OK")
</pallas_src>

<mosaic_0001>
module attributes {stable_mosaic.version = 11 : i64} {
  func.func @_sw_v2_kernel(%arg0: i32, %arg1: i32, %arg2: memref<2x32x4096xf32, #tpu.memory_space<vmem>>, %arg3: memref<32x1xf32, #tpu.memory_space<vmem>>, %arg4: memref<2x32x4096xf32, #tpu.memory_space<vmem>>) attributes {dimension_semantics = [#tpu.dimension_semantics<parallel>, #tpu.dimension_semantics<parallel>], iteration_bounds = array<i64: 1, 1>, scalar_prefetch = 0 : i64, scratch_operands = 0 : i64, tpu.core_type = #tpu.core_type<tc>, window_params = [{transform_indices = @transform_0, window_bounds = array<i64: 2, 32, 4096>}, {pipeline_mode = #tpu.pipeline_mode<synchronous>, transform_indices = @transform_1, window_bounds = array<i64: 32, 1>}, {transform_indices = @transform_2, window_bounds = array<i64: 2, 32, 4096>}]} {
    %c0 = arith.constant 0 : index
    %c0_0 = arith.constant 0 : index
    %0 = vector.load %arg3[%c0, %c0_0] : memref<32x1xf32, #tpu.memory_space<vmem>>, vector<32x1xf32>
    %c0_1 = arith.constant 0 : index
    %c0_2 = arith.constant 0 : index
    %c0_3 = arith.constant 0 : index
    %1 = vector.load %arg2[%c0_1, %c0_2, %c0_3] : memref<2x32x4096xf32, #tpu.memory_space<vmem>>, vector<1x32x4096xf32>
    %2 = vector.shape_cast %1 : vector<1x32x4096xf32> to vector<32x4096xf32>
    %3 = vector.broadcast %0 : vector<32x1xf32> to vector<32x4096xf32>
    %4 = arith.mulf %2, %3 : vector<32x4096xf32>
    %cst = arith.constant dense<0.000000e+00> : vector<4096xf32>
    %5 = vector.multi_reduction <add>, %4, %cst [0] : vector<32x4096xf32> to vector<4096xf32>
    %6 = vector.shape_cast %5 : vector<4096xf32> to vector<1x4096xf32>
    %7 = arith.negf %6 : vector<1x4096xf32>
    %8 = math.exp %7 : vector<1x4096xf32>
    %cst_4 = arith.constant 1.000000e+00 : f32
    %9 = vector.broadcast %cst_4 : f32 to vector<1x4096xf32>
    %10 = arith.addf %9, %8 : vector<1x4096xf32>
    %11 = arith.divf %9, %10 : vector<1x4096xf32>
    %12 = vector.broadcast %11 : vector<1x4096xf32> to vector<32x4096xf32>
    %13 = arith.mulf %2, %12 : vector<32x4096xf32>
    %c0_5 = arith.constant 0 : index
    %c0_6 = arith.constant 0 : index
    %c0_7 = arith.constant 0 : index
    %14 = vector.load %arg4[%c0_5, %c0_6, %c0_7] : memref<2x32x4096xf32, #tpu.memory_space<vmem>>, vector<1x32x4096xf32>
    %15 = vector.shape_cast %14 : vector<1x32x4096xf32> to vector<32x4096xf32>
    %16 = vector.shape_cast %13 : vector<32x4096xf32> to vector<1x32x4096xf32>
    tpu.vector_store %arg4[%c0_5, %c0_6, %c0_7], %16 {strides = array<i32>} : memref<2x32x4096xf32, #tpu.memory_space<vmem>>, vector<1x32x4096xf32>,
    %c1 = arith.constant 1 : index
    %c0_8 = arith.constant 0 : index
    %c0_9 = arith.constant 0 : index
    %17 = vector.load %arg2[%c1, %c0_8, %c0_9] : memref<2x32x4096xf32, #tpu.memory_space<vmem>>, vector<1x32x4096xf32>
    %18 = vector.shape_cast %17 : vector<1x32x4096xf32> to vector<32x4096xf32>
    %19 = vector.broadcast %0 : vector<32x1xf32> to vector<32x4096xf32>
    %20 = arith.mulf %18, %19 : vector<32x4096xf32>
    %cst_10 = arith.constant dense<0.000000e+00> : vector<4096xf32>
    %21 = vector.multi_reduction <add>, %20, %cst_10 [0] : vector<32x4096xf32> to vector<4096xf32>
    %22 = vector.shape_cast %21 : vector<4096xf32> to vector<1x4096xf32>
    %23 = arith.negf %22 : vector<1x4096xf32>
    %24 = math.exp %23 : vector<1x4096xf32>
    %cst_11 = arith.constant 1.000000e+00 : f32
    %25 = vector.broadcast %cst_11 : f32 to vector<1x4096xf32>
    %26 = arith.addf %25, %24 : vector<1x4096xf32>
    %27 = arith.divf %25, %26 : vector<1x4096xf32>
    %28 = vector.broadcast %27 : vector<1x4096xf32> to vector<32x4096xf32>
    %29 = arith.mulf %18, %28 : vector<32x4096xf32>
    %c1_12 = arith.constant 1 : index
    %c0_13 = arith.constant 0 : index
    %c0_14 = arith.constant 0 : index
    %30 = vector.load %arg4[%c1_12, %c0_13, %c0_14] : memref<2x32x4096xf32, #tpu.memory_space<vmem>>, vector<1x32x4096xf32>
    %31 = vector.shape_cast %30 : vector<1x32x4096xf32> to vector<32x4096xf32>
    %32 = vector.shape_cast %29 : vector<32x4096xf32> to vector<1x32x4096xf32>
    tpu.vector_store %arg4[%c1_12, %c0_13, %c0_14], %32 {strides = array<i32>} : memref<2x32x4096xf32, #tpu.memory_space<vmem>>, vector<1x32x4096xf32>,
    return
  }
  func.func @transform_0(%arg0: i32, %arg1: i32) -> (i32, i32, i32) {
    %c0_i32 = arith.constant 0 : i32
    %c0_i32_0 = arith.constant 0 : i32
    return %arg0, %c0_i32, %arg1 : i32, i32, i32
  }
  func.func @transform_1(%arg0: i32, %arg1: i32) -> (i32, i32) {
    %c0_i32 = arith.constant 0 : i32
    %c0_i32_0 = arith.constant 0 : i32
    %c0_i32_1 = arith.constant 0 : i32
    return %c0_i32, %c0_i32_0 : i32, i32
  }
  func.func @transform_2(%arg0: i32, %arg1: i32) -> (i32, i32, i32) {
    %c0_i32 = arith.constant 0 : i32
    %c0_i32_0 = arith.constant 0 : i32
    return %arg0, %c0_i32, %arg1 : i32, i32, i32
  }
}

</mosaic_0001>

<llo_original>
// kernel: spatial_weighting_v2.1
$region0: #{spatial_weighting_v2.1}
  #allocation0 [shape = 'u32[]', space=smem, size = 0x4, offset = 0x4, fixed_abs, tag = 'smem constant byte address 0x4 - core index']
  #allocation1 [shape = 'u32[144,128]{1,0:T(1,128)}', space=vmem, size = 0x12000, scoped, tag = 'internal scratch']
  %s0 = inlined_call_operand.vmem [shape: f32[2,32,4096], index: 0, kind: input, shape index: {}]
  %s1 = inlined_call_operand.vmem [shape: f32[32,1], index: 1, kind: input, shape index: {}]
  %s2 = inlined_call_operand.vmem [shape: f32[2,32,4096], index: 2, kind: output, shape index: {}]
  %s3 = sld [smem:[#allocation0]]
  $region18: #{spatial_weighting_v2.1} parent=0
    _
  %s5 = ssub.s32 1, %s3
  %s6 = scalar_select 0, %s5, %s3
  // Predicated region
  $region2: #{spatial_weighting_v2.1} parent=0 // pred_check
    _
  $region3: #{spatial_weighting_v2.1} parent=0 // pred_check_branch
    %8 = sbr.rel (0) target = $region5
  $region4: #{spatial_weighting_v2.1} parent=0 // pred_region
    _
  $region5: #{spatial_weighting_v2.1} parent=0 // pred_fallthru
    _
  // Predicated region
  $region6: #{spatial_weighting_v2.1} parent=0 // pred_check
    _
  $region7: #{spatial_weighting_v2.1} parent=0 // pred_check_branch
    %10 = sbr.rel (0) target = $region9
  $region8: #{spatial_weighting_v2.1} parent=0 // pred_region
    _
  $region9: #{spatial_weighting_v2.1} parent=0 // pred_fallthru
    _
  %v11 = vld [vmem:[%s1] sm:$0xff]
  %v12 = vld [vmem:[%s1 + $0x8] sm:$0xff]
  %v13 = vld [vmem:[%s1 + $0x10] sm:$0xff]
  %v14 = vld [vmem:[%s1 + $0x18] sm:$0xff]
  %v15 = vld [vmem:[%s0] sm:$0xff]
  %v16 = vld [vmem:[%s0 + $0x8] sm:$0xff]
  %v17 = vld [vmem:[%s0 + $0x10] sm:$0xff]
  %v18 = vld [vmem:[%s0 + $0x18] sm:$0xff]
  %v19 = vld [vmem:[%s0 + $0x20] sm:$0xff]
  %v20 = vld [vmem:[%s0 + $0x28] sm:$0xff]
  %v21 = vld [vmem:[%s0 + $0x30] sm:$0xff]
  %v22 = vld [vmem:[%s0 + $0x38] sm:$0xff]
  %v23 = vld [vmem:[%s0 + $0x40] sm:$0xff]
  %v24 = vld [vmem:[%s0 + $0x48] sm:$0xff]
  %v25 = vld [vmem:[%s0 + $0x50] sm:$0xff]
  %v26 = vld [vmem:[%s0 + $0x58] sm:$0xff]
  %v27 = vld [vmem:[%s0 + $0x60] sm:$0xff]
  %v28 = vld [vmem:[%s0 + $0x68] sm:$0xff]
  %v29 = vld [vmem:[%s0 + $0x70] sm:$0xff]
  %v30 = vld [vmem:[%s0 + $0x78] sm:$0xff]
  %v31 = vld [vmem:[%s0 + $0x80] sm:$0xff]
  %v32 = vld [vmem:[%s0 + $0x88] sm:$0xff]
  %v33 = vld [vmem:[%s0 + $0x90] sm:$0xff]
  %v34 = vld [vmem:[%s0 + $0x98] sm:$0xff]
  %v35 = vld [vmem:[%s0 + $0xa0] sm:$0xff]
  %v36 = vld [vmem:[%s0 + $0xa8] sm:$0xff]
  %v37 = vld [vmem:[%s0 + $0xb0] sm:$0xff]
  %v38 = vld [vmem:[%s0 + $0xb8] sm:$0xff]
  %v39 = vld [vmem:[%s0 + $0xc0] sm:$0xff]
  %v40 = vld [vmem:[%s0 + $0xc8] sm:$0xff]
  %v41 = vld [vmem:[%s0 + $0xd0] sm:$0xff]
  %v42 = vld [vmem:[%s0 + $0xd8] sm:$0xff]
  %v43 = vld [vmem:[%s0 + $0xe0] sm:$0xff]
  %v44 = vld [vmem:[%s0 + $0xe8] sm:$0xff]
  %v45 = vld [vmem:[%s0 + $0xf0] sm:$0xff]
  %v46 = vld [vmem:[%s0 + $0xf8] sm:$0xff]
  %v47 = vld [vmem:[%s0 + $0x100] sm:$0xff]
  %v48 = vld [vmem:[%s0 + $0x108] sm:$0xff]
  %v49 = vld [vmem:[%s0 + $0x110] sm:$0xff]
  %v50 = vld [vmem:[%s0 + $0x118] sm:$0xff]
  %v51 = vld [vmem:[%s0 + $0x120] sm:$0xff]
  %v52 = vld [vmem:[%s0 + $0x128] sm:$0xff]
  %v53 = vld [vmem:[%s0 + $0x130] sm:$0xff]
  %v54 = vld [vmem:[%s0 + $0x138] sm:$0xff]
  %v55 = vld [vmem:[%s0 + $0x140] sm:$0xff]
  %v56 = vld [vmem:[%s0 + $0x148] sm:$0xff]
  %v57 = vld [vmem:[%s0 + $0x150] sm:$0xff]
  %v58 = vld [vmem:[%s0 + $0x158] sm:$0xff]
  %v59 = vld [vmem:[%s0 + $0x160] sm:$0xff]
  %v60 = vld [vmem:[%s0 + $0x168] sm:$0xff]
  %v61 = vld [vmem:[%s0 + $0x170] sm:$0xff]
  %v62 = vld [vmem:[%s0 + $0x178] sm:$0xff]
  %v63 = vld [vmem:[%s0 + $0x180] sm:$0xff]
  %v64 = vld [vmem:[%s0 + $0x188] sm:$0xff]
  %v65 = vld [vmem:[%s0 + $0x190] sm:$0xff]
  %v66 = vld [vmem:[%s0 + $0x198] sm:$0xff]
  %v67 = vld [vmem:[%s0 + $0x1a0] sm:$0xff]
  %v68 = vld [vmem:[%s0 + $0x1a8] sm:$0xff]
  %v69 = vld [vmem:[%s0 + $0x1b0] sm:$0xff]
  %v70 = vld [vmem:[%s0 + $0x1b8] sm:$0xff]
  %v71 = vld [vmem:[%s0 + $0x1c0] sm:$0xff]
  %v72 = vld [vmem:[%s0 + $0x1c8] sm:$0xff]
  %v73 = vld [vmem:[%s0 + $0x1d0] sm:$0xff]
  %v74 = vld [vmem:[%s0 + $0x1d8] sm:$0xff]
  %v75 = vld [vmem:[%s0 + $0x1e0] sm:$0xff]
  %v76 = vld [vmem:[%s0 + $0x1e8] sm:$0xff]
  %v77 = vld [vmem:[%s0 + $0x1f0] sm:$0xff]
  %v78 = vld [vmem:[%s0 + $0x1f8] sm:$0xff]
  %v79 = vld [vmem:[%s0 + $0x200] sm:$0xff]
  %v80 = vld [vmem:[%s0 + $0x208] sm:$0xff]
  %v81 = vld [vmem:[%s0 + $0x210] sm:$0xff]
  %v82 = vld [vmem:[%s0 + $0x218] sm:$0xff]
  %v83 = vld [vmem:[%s0 + $0x220] sm:$0xff]
  %v84 = vld [vmem:[%s0 + $0x228] sm:$0xff]
  %v85 = vld [vmem:[%s0 + $0x230] sm:$0xff]
  %v86 = vld [vmem:[%s0 + $0x238] sm:$0xff]
  %v87 = vld [vmem:[%s0 + $0x240] sm:$0xff]
  %v88 = vld [vmem:[%s0 + $0x248] sm:$0xff]
  %v89 = vld [vmem:[%s0 + $0x250] sm:$0xff]
  %v90 = vld [vmem:[%s0 + $0x258] sm:$0xff]
  %v91 = vld [vmem:[%s0 + $0x260] sm:$0xff]
  %v92 = vld [vmem:[%s0 + $0x268] sm:$0xff]
  %v93 = vld [vmem:[%s0 + $0x270] sm:$0xff]
  %v94 = vld [vmem:[%s0 + $0x278] sm:$0xff]
  %v95 = vld [vmem:[%s0 + $0x280] sm:$0xff]
  %v96 = vld [vmem:[%s0 + $0x288] sm:$0xff]
  %v97 = vld [vmem:[%s0 + $0x290] sm:$0xff]
  %v98 = vld [vmem:[%s0 + $0x298] sm:$0xff]
  %v99 = vld [vmem:[%s0 + $0x2a0] sm:$0xff]
  %v100 = vld [vmem:[%s0 + $0x2a8] sm:$0xff]
  %v101 = vld [vmem:[%s0 + $0x2b0] sm:$0xff]
  %v102 = vld [vmem:[%s0 + $0x2b8] sm:$0xff]
  %v103 = vld [vmem:[%s0 + $0x2c0] sm:$0xff]
  %v104 = vld [vmem:[%s0 + $0x2c8] sm:$0xff]
  %v105 = vld [vmem:[%s0 + $0x2d0] sm:$0xff]
  %v106 = vld [vmem:[%s0 + $0x2d8] sm:$0xff]
  %v107 = vld [vmem:[%s0 + $0x2e0] sm:$0xff]
  %v108 = vld [vmem:[%s0 + $0x2e8] sm:$0xff]
  %v109 = vld [vmem:[%s0 + $0x2f0] sm:$0xff]
  %v110 = vld [vmem:[%s0 + $0x2f8] sm:$0xff]
  %v111 = vld [vmem:[%s0 + $0x300] sm:$0xff]
  %v112 = vld [vmem:[%s0 + $0x308] sm:$0xff]
  %v113 = vld [vmem:[%s0 + $0x310] sm:$0xff]
  %v114 = vld [vmem:[%s0 + $0x318] sm:$0xff]
  %v115 = vld [vmem:[%s0 + $0x320] sm:$0xff]
  %v116 = vld [vmem:[%s0 + $0x328] sm:$0xff]
  %v117 = vld [vmem:[%s0 + $0x330] sm:$0xff]
  %v118 = vld [vmem:[%s0 + $0x338] sm:$0xff]
  %v119 = vld [vmem:[%s0 + $0x340] sm:$0xff]
  %v120 = vld [vmem:[%s0 + $0x348] sm:$0xff]
  %v121 = vld [vmem:[%s0 + $0x350] sm:$0xff]
  %v122 = vld [vmem:[%s0 + $0x358] sm:$0xff]
  %v123 = vld [vmem:[%s0 + $0x360] sm:$0xff]
  %v124 = vld [vmem:[%s0 + $0x368] sm:$0xff]
  %v125 = vld [vmem:[%s0 + $0x370] sm:$0xff]
  %v126 = vld [vmem:[%s0 + $0x378] sm:$0xff]
  %v127 = vld [vmem:[%s0 + $0x380] sm:$0xff]
  %v128 = vld [vmem:[%s0 + $0x388] sm:$0xff]
  %v129 = vld [vmem:[%s0 + $0x390] sm:$0xff]
  %v130 = vld [vmem:[%s0 + $0x398] sm:$0xff]
  %v131 = vld [vmem:[%s0 + $0x3a0] sm:$0xff]
  %v132 = vld [vmem:[%s0 + $0x3a8] sm:$0xff]
  %v133 = vld [vmem:[%s0 + $0x3b0] sm:$0xff]
  %v134 = vld [vmem:[%s0 + $0x3b8] sm:$0xff]
  %v135 = vld [vmem:[%s0 + $0x3c0] sm:$0xff]
  %v136 = vld [vmem:[%s0 + $0x3c8] sm:$0xff]
  %v137 = vld [vmem:[%s0 + $0x3d0] sm:$0xff]
  %v138 = vld [vmem:[%s0 + $0x3d8] sm:$0xff]
  %v139 = vld [vmem:[%s0 + $0x3e0] sm:$0xff]
  %v140 = vld [vmem:[%s0 + $0x3e8] sm:$0xff]
  %v141 = vld [vmem:[%s0 + $0x3f0] sm:$0xff]
  %v142 = vld [vmem:[%s0 + $0x3f8] sm:$0xff]
  %144 = vset.pattern.permute.xlu0 0
  %145 = vperm.xlu0 %144, %v11
  %v146 = vpop.permute.xlu0 %145
  %149 = vset.pattern.permute.xlu0 0
  %150 = vperm.xlu0 %149, %v12
  %v151 = vpop.permute.xlu0 %150
  %154 = vset.pattern.permute.xlu0 0
  %155 = vperm.xlu0 %154, %v13
  %v156 = vpop.permute.xlu0 %155
  %159 = vset.pattern.permute.xlu0 0
  %160 = vperm.xlu0 %159, %v14
  %v161 = vpop.permute.xlu0 %160
  %v163 = vmul.f32 %v15, %v146
  %v164 = vmul.f32 %v16, %v146
  %v165 = vmul.f32 %v17, %v146
  %v166 = vmul.f32 %v18, %v146
  %v167 = vmul.f32 %v19, %v146
  %v168 = vmul.f32 %v20, %v146
  %v169 = vmul.f32 %v21, %v146
  %v170 = vmul.f32 %v22, %v146
  %v171 = vmul.f32 %v23, %v146
  %v172 = vmul.f32 %v24, %v146
  %v173 = vmul.f32 %v25, %v146
  %v174 = vmul.f32 %v26, %v146
  %v175 = vmul.f32 %v27, %v146
  %v176 = vmul.f32 %v28, %v146
  %v177 = vmul.f32 %v29, %v146
  %v178 = vmul.f32 %v30, %v146
  %v179 = vmul.f32 %v31, %v146
  %v180 = vmul.f32 %v32, %v146
  %v181 = vmul.f32 %v33, %v146
  %v182 = vmul.f32 %v34, %v146
  %v183 = vmul.f32 %v35, %v146
  %v184 = vmul.f32 %v36, %v146
  %v185 = vmul.f32 %v37, %v146
  %v186 = vmul.f32 %v38, %v146
  %v187 = vmul.f32 %v39, %v146
  %v188 = vmul.f32 %v40, %v146
  %v189 = vmul.f32 %v41, %v146
  %v190 = vmul.f32 %v42, %v146
  %v191 = vmul.f32 %v43, %v146
  %v192 = vmul.f32 %v44, %v146
  %v193 = vmul.f32 %v45, %v146
  %v194 = vmul.f32 %v46, %v146
  %v195 = vmul.f32 %v47, %v151
  %v196 = vmul.f32 %v48, %v151
  %v197 = vmul.f32 %v49, %v151
  %v198 = vmul.f32 %v50, %v151
  %v199 = vmul.f32 %v51, %v151
  %v200 = vmul.f32 %v52, %v151
  %v201 = vmul.f32 %v53, %v151
  %v202 = vmul.f32 %v54, %v151
  %v203 = vmul.f32 %v55, %v151
  %v204 = vmul.f32 %v56, %v151
  %v205 = vmul.f32 %v57, %v151
  %v206 = vmul.f32 %v58, %v151
  %v207 = vmul.f32 %v59, %v151
  %v208 = vmul.f32 %v60, %v151
  %v209 = vmul.f32 %v61, %v151
  %v210 = vmul.f32 %v62, %v151
  %v211 = vmul.f32 %v63, %v151
  %v212 = vmul.f32 %v64, %v151
  %v213 = vmul.f32 %v65, %v151
  %v214 = vmul.f32 %v66, %v151
  %v215 = vmul.f32 %v67, %v151
  %v216 = vmul.f32 %v68, %v151
  %v217 = vmul.f32 %v69, %v151
  %v218 = vmul.f32 %v70, %v151
  %v219 = vmul.f32 %v71, %v151
  %v220 = vmul.f32 %v72, %v151
  %v221 = vmul.f32 %v73, %v151
  %v222 = vmul.f32 %v74, %v151
  %v223 = vmul.f32 %v75, %v151
  %v224 = vmul.f32 %v76, %v151
  %v225 = vmul.f32 %v77, %v151
  %v226 = vmul.f32 %v78, %v151
  %v227 = vmul.f32 %v79, %v156
  %v228 = vmul.f32 %v80, %v156
  %v229 = vmul.f32 %v81, %v156
  %v230 = vmul.f32 %v82, %v156
  %v231 = vmul.f32 %v83, %v156
  %v232 = vmul.f32 %v84, %v156
  %v233 = vmul.f32 %v85, %v156
  %v234 = vmul.f32 %v86, %v156
  %v235 = vmul.f32 %v87, %v156
  %v236 = vmul.f32 %v88, %v156
  %v237 = vmul.f32 %v89, %v156
  %v238 = vmul.f32 %v90, %v156
  %v239 = vmul.f32 %v91, %v156
  %v240 = vmul.f32 %v92, %v156
  %v241 = vmul.f32 %v93, %v156
  %v242 = vmul.f32 %v94, %v156
  %v243 = vmul.f32 %v95, %v156
  %v244 = vmul.f32 %v96, %v156
  %v245 = vmul.f32 %v97, %v156
  %v246 = vmul.f32 %v98, %v156
  %v247 = vmul.f32 %v99, %v156
  %v248 = vmul.f32 %v100, %v156
  %v249 = vmul.f32 %v101, %v156
  %v250 = vmul.f32 %v102, %v156
  %v251 = vmul.f32 %v103, %v156
  %v252 = vmul.f32 %v104, %v156
  %v253 = vmul.f32 %v105, %v156
  %v254 = vmul.f32 %v106, %v156
  %v255 = vmul.f32 %v107, %v156
  %v256 = vmul.f32 %v108, %v156
  %v257 = vmul.f32 %v109, %v156
  %v258 = vmul.f32 %v110, %v156
  %v259 = vmul.f32 %v111, %v161
  %v260 = vmul.f32 %v112, %v161
  %v261 = vmul.f32 %v113, %v161
  %v262 = vmul.f32 %v114, %v161
  %v263 = vmul.f32 %v115, %v161
  %v264 = vmul.f32 %v116, %v161
  %v265 = vmul.f32 %v117, %v161
  %v266 = vmul.f32 %v118, %v161
  %v267 = vmul.f32 %v119, %v161
  %v268 = vmul.f32 %v120, %v161
  %v269 = vmul.f32 %v121, %v161
  %v270 = vmul.f32 %v122, %v161
  %v271 = vmul.f32 %v123, %v161
  %v272 = vmul.f32 %v124, %v161
  %v273 = vmul.f32 %v125, %v161
  %v274 = vmul.f32 %v126, %v161
  %v275 = vmul.f32 %v127, %v161
  %v276 = vmul.f32 %v128, %v161
  %v277 = vmul.f32 %v129, %v161
  %v278 = vmul.f32 %v130, %v161
  %v279 = vmul.f32 %v131, %v161
  %v280 = vmul.f32 %v132, %v161
  %v281 = vmul.f32 %v133, %v161
  %v282 = vmul.f32 %v134, %v161
  %v283 = vmul.f32 %v135, %v161
  %v284 = vmul.f32 %v136, %v161
  %v285 = vmul.f32 %v137, %v161
  %v286 = vmul.f32 %v138, %v161
  %v287 = vmul.f32 %v139, %v161
  %v288 = vmul.f32 %v140, %v161
  %v289 = vmul.f32 %v141, %v161
  %v290 = vmul.f32 %v142, %v161
  %v291 = vadd.f32 %v163, %v195
  %v292 = vadd.f32 %v291, %v227
  %v293 = vadd.f32 %v292, %v259
  %v294 = vrot.slane %v293, 4
  %v295 = vadd.f32 %v293, %v294
  %v296 = vrot.slane %v295, 2
  %v297 = vadd.f32 %v295, %v296
  %v298 = vrot.slane %v297, 1
  %v299 = vadd.f32 %v297, %v298
  %v300 = vadd.f32 %v164, %v196
  %v301 = vadd.f32 %v300, %v228
  %v302 = vadd.f32 %v301, %v260
  %v303 = vrot.slane %v302, 4
  %v304 = vadd.f32 %v302, %v303
  %v305 = vrot.slane %v304, 2
  %v306 = vadd.f32 %v304, %v305
  %v307 = vrot.slane %v306, 1
  %v308 = vadd.f32 %v306, %v307
  %v309 = vadd.f32 %v165, %v197
  %v310 = vadd.f32 %v309, %v229
  %v311 = vadd.f32 %v310, %v261
  %v312 = vrot.slane %v311, 4
  %v313 = vadd.f32 %v311, %v312
  %v314 = vrot.slane %v313, 2
  %v315 = vadd.f32 %v313, %v314
  %v316 = vrot.slane %v315, 1
  %v317 = vadd.f32 %v315, %v316
  %v318 = vadd.f32 %v166, %v198
  %v319 = vadd.f32 %v318, %v230
  %v320 = vadd.f32 %v319, %v262
  %v321 = vrot.slane %v320, 4
  %v322 = vadd.f32 %v320, %v321
  %v323 = vrot.slane %v322, 2
  %v324 = vadd.f32 %v322, %v323
  %v325 = vrot.slane %v324, 1
  %v326 = vadd.f32 %v324, %v325
  %v327 = vadd.f32 %v167, %v199
  %v328 = vadd.f32 %v327, %v231
  %v329 = vadd.f32 %v328, %v263
  %v330 = vrot.slane %v329, 4
  %v331 = vadd.f32 %v329, %v330
  %v332 = vrot.slane %v331, 2
  %v333 = vadd.f32 %v331, %v332
  %v334 = vrot.slane %v333, 1
  %v335 = vadd.f32 %v333, %v334
  %v336 = vadd.f32 %v168, %v200
  %v337 = vadd.f32 %v336, %v232
  %v338 = vadd.f32 %v337, %v264
  %v339 = vrot.slane %v338, 4
  %v340 = vadd.f32 %v338, %v339
  %v341 = vrot.slane %v340, 2
  %v342 = vadd.f32 %v340, %v341
  %v343 = vrot.slane %v342, 1
  %v344 = vadd.f32 %v342, %v343
  %v345 = vadd.f32 %v169, %v201
  %v346 = vadd.f32 %v345, %v233
  %v347 = vadd.f32 %v346, %v265
  %v348 = vrot.slane %v347, 4
  %v349 = vadd.f32 %v347, %v348
  %v350 = vrot.slane %v349, 2
  %v351 = vadd.f32 %v349, %v350
  %v352 = vrot.slane %v351, 1
  %v353 = vadd.f32 %v351, %v352
  %v354 = vadd.f32 %v170, %v202
  %v355 = vadd.f32 %v354, %v234
  %v356 = vadd.f32 %v355, %v266
  %v357 = vrot.slane %v356, 4
  %v358 = vadd.f32 %v356, %v357
  %v359 = vrot.slane %v358, 2
  %v360 = vadd.f32 %v358, %v359
  %v361 = vrot.slane %v360, 1
  %v362 = vadd.f32 %v360, %v361
  %v363 = vadd.f32 %v171, %v203
  %v364 = vadd.f32 %v363, %v235
  %v365 = vadd.f32 %v364, %v267
  %v366 = vrot.slane %v365, 4
  %v367 = vadd.f32 %v365, %v366
  %v368 = vrot.slane %v367, 2
  %v369 = vadd.f32 %v367, %v368
  %v370 = vrot.slane %v369, 1
  %v371 = vadd.f32 %v369, %v370
  %v372 = vadd.f32 %v172, %v204
  %v373 = vadd.f32 %v372, %v236
  %v374 = vadd.f32 %v373, %v268
  %v375 = vrot.slane %v374, 4
  %v376 = vadd.f32 %v374, %v375
  %v377 = vrot.slane %v376, 2
  %v378 = vadd.f32 %v376, %v377
  %v379 = vrot.slane %v378, 1
  %v380 = vadd.f32 %v378, %v379
  %v381 = vadd.f32 %v173, %v205
  %v382 = vadd.f32 %v381, %v237
  %v383 = vadd.f32 %v382, %v269
  %v384 = vrot.slane %v383, 4
  %v385 = vadd.f32 %v383, %v384
  %v386 = vrot.slane %v385, 2
  %v387 = vadd.f32 %v385, %v386
  %v388 = vrot.slane %v387, 1
  %v389 = vadd.f32 %v387, %v388
  %v390 = vadd.f32 %v174, %v206
  %v391 = vadd.f32 %v390, %v238
  %v392 = vadd.f32 %v391, %v270
  %v393 = vrot.slane %v392, 4
  %v394 = vadd.f32 %v392, %v393
  %v395 = vrot.slane %v394, 2
  %v396 = vadd.f32 %v394, %v395
  %v397 = vrot.slane %v396, 1
  %v398 = vadd.f32 %v396, %v397
  %v399 = vadd.f32 %v175, %v207
  %v400 = vadd.f32 %v399, %v239
  %v401 = vadd.f32 %v400, %v271
  %v402 = vrot.slane %v401, 4
  %v403 = vadd.f32 %v401, %v402
  %v404 = vrot.slane %v403, 2
  %v405 = vadd.f32 %v403, %v404
  %v406 = vrot.slane %v405, 1
  %v407 = vadd.f32 %v405, %v406
  %v408 = vadd.f32 %v176, %v208
  %v409 = vadd.f32 %v408, %v240
  %v410 = vadd.f32 %v409, %v272
  %v411 = vrot.slane %v410, 4
  %v412 = vadd.f32 %v410, %v411
  %v413 = vrot.slane %v412, 2
  %v414 = vadd.f32 %v412, %v413
  %v415 = vrot.slane %v414, 1
  %v416 = vadd.f32 %v414, %v415
  %v417 = vadd.f32 %v177, %v209
  %v418 = vadd.f32 %v417, %v241
  %v419 = vadd.f32 %v418, %v273
  %v420 = vrot.slane %v419, 4
  %v421 = vadd.f32 %v419, %v420
  %v422 = vrot.slane %v421, 2
  %v423 = vadd.f32 %v421, %v422
  %v424 = vrot.slane %v423, 1
  %v425 = vadd.f32 %v423, %v424
  %v426 = vadd.f32 %v178, %v210
  %v427 = vadd.f32 %v426, %v242
  %v428 = vadd.f32 %v427, %v274
  %v429 = vrot.slane %v428, 4
  %v430 = vadd.f32 %v428, %v429
  %v431 = vrot.slane %v430, 2
  %v432 = vadd.f32 %v430, %v431
  %v433 = vrot.slane %v432, 1
  %v434 = vadd.f32 %v432, %v433
  %v435 = vadd.f32 %v179, %v211
  %v436 = vadd.f32 %v435, %v243
  %v437 = vadd.f32 %v436, %v275
  %v438 = vrot.slane %v437, 4
  %v439 = vadd.f32 %v437, %v438
  %v440 = vrot.slane %v439, 2
  %v441 = vadd.f32 %v439, %v440
  %v442 = vrot.slane %v441, 1
  %v443 = vadd.f32 %v441, %v442
  %v444 = vadd.f32 %v180, %v212
  %v445 = vadd.f32 %v444, %v244
  %v446 = vadd.f32 %v445, %v276
  %v447 = vrot.slane %v446, 4
  %v448 = vadd.f32 %v446, %v447
  %v449 = vrot.slane %v448, 2
  %v450 = vadd.f32 %v448, %v449
  %v451 = vrot.slane %v450, 1
  %v452 = vadd.f32 %v450, %v451
  %v453 = vadd.f32 %v181, %v213
  %v454 = vadd.f32 %v453, %v245
  %v455 = vadd.f32 %v454, %v277
  %v456 = vrot.slane %v455, 4
  %v457 = vadd.f32 %v455, %v456
  %v458 = vrot.slane %v457, 2
  %v459 = vadd.f32 %v457, %v458
  %v460 = vrot.slane %v459, 1
  %v461 = vadd.f32 %v459, %v460
  %v462 = vadd.f32 %v182, %v214
  %v463 = vadd.f32 %v462, %v246
  %v464 = vadd.f32 %v463, %v278
  %v465 = vrot.slane %v464, 4
  %v466 = vadd.f32 %v464, %v465
  %v467 = vrot.slane %v466, 2
  %v468 = vadd.f32 %v466, %v467
  %v469 = vrot.slane %v468, 1
  %v470 = vadd.f32 %v468, %v469
  %v471 = vadd.f32 %v183, %v215
  %v472 = vadd.f32 %v471, %v247
  %v473 = vadd.f32 %v472, %v279
  %v474 = vrot.slane %v473, 4
  %v475 = vadd.f32 %v473, %v474
  %v476 = vrot.slane %v475, 2
  %v477 = vadd.f32 %v475, %v476
  %v478 = vrot.slane %v477, 1
  %v479 = vadd.f32 %v477, %v478
  %v480 = vadd.f32 %v184, %v216
  %v481 = vadd.f32 %v480, %v248
  %v482 = vadd.f32 %v481, %v280
  %v483 = vrot.slane %v482, 4
  %v484 = vadd.f32 %v482, %v483
  %v485 = vrot.slane %v484, 2
  %v486 = vadd.f32 %v484, %v485
  %v487 = vrot.slane %v486, 1
  %v488 = vadd.f32 %v486, %v487
  %v489 = vadd.f32 %v185, %v217
  %v490 = vadd.f32 %v489, %v249
  %v491 = vadd.f32 %v490, %v281
  %v492 = vrot.slane %v491, 4
  %v493 = vadd.f32 %v491, %v492
  %v494 = vrot.slane %v493, 2
  %v495 = vadd.f32 %v493, %v494
  %v496 = vrot.slane %v495, 1
  %v497 = vadd.f32 %v495, %v496
  %v498 = vadd.f32 %v186, %v218
  %v499 = vadd.f32 %v498, %v250
  %v500 = vadd.f32 %v499, %v282
  %v501 = vrot.slane %v500, 4
  %v502 = vadd.f32 %v500, %v501
  %v503 = vrot.slane %v502, 2
  %v504 = vadd.f32 %v502, %v503
  %v505 = vrot.slane %v504, 1
  %v506 = vadd.f32 %v504, %v505
  %v507 = vadd.f32 %v187, %v219
  %v508 = vadd.f32 %v507, %v251
  %v509 = vadd.f32 %v508, %v283
  %v510 = vrot.slane %v509, 4
  %v511 = vadd.f32 %v509, %v510
  %v512 = vrot.slane %v511, 2
  %v513 = vadd.f32 %v511, %v512
  %v514 = vrot.slane %v513, 1
  %v515 = vadd.f32 %v513, %v514
  %v516 = vadd.f32 %v188, %v220
  %v517 = vadd.f32 %v516, %v252
  %v518 = vadd.f32 %v517, %v284
  %v519 = vrot.slane %v518, 4
  %v520 = vadd.f32 %v518, %v519
  %v521 = vrot.slane %v520, 2
  %v522 = vadd.f32 %v520, %v521
  %v523 = vrot.slane %v522, 1
  %v524 = vadd.f32 %v522, %v523
  %v525 = vadd.f32 %v189, %v221
  %v526 = vadd.f32 %v525, %v253
  %v527 = vadd.f32 %v526, %v285
  %v528 = vrot.slane %v527, 4
  %v529 = vadd.f32 %v527, %v528
  %v530 = vrot.slane %v529, 2
  %v531 = vadd.f32 %v529, %v530
  %v532 = vrot.slane %v531, 1
  %v533 = vadd.f32 %v531, %v532
  %v534 = vadd.f32 %v190, %v222
  %v535 = vadd.f32 %v534, %v254
  %v536 = vadd.f32 %v535, %v286
  %v537 = vrot.slane %v536, 4
  %v538 = vadd.f32 %v536, %v537
  %v539 = vrot.slane %v538, 2
  %v540 = vadd.f32 %v538, %v539
  %v541 = vrot.slane %v540, 1
  %v542 = vadd.f32 %v540, %v541
  %v543 = vadd.f32 %v191, %v223
  %v544 = vadd.f32 %v543, %v255
  %v545 = vadd.f32 %v544, %v287
  %v546 = vrot.slane %v545, 4
  %v547 = vadd.f32 %v545, %v546
  %v548 = vrot.slane %v547, 2
  %v549 = vadd.f32 %v547, %v548
  %v550 = vrot.slane %v549, 1
  %v551 = vadd.f32 %v549, %v550
  %v552 = vadd.f32 %v192, %v224
  %v553 = vadd.f32 %v552, %v256
  %v554 = vadd.f32 %v553, %v288
  %v555 = vrot.slane %v554, 4
  %v556 = vadd.f32 %v554, %v555
  %v557 = vrot.slane %v556, 2
  %v558 = vadd.f32 %v556, %v557
  %v559 = vrot.slane %v558, 1
  %v560 = vadd.f32 %v558, %v559
  %v561 = vadd.f32 %v193, %v225
  %v562 = vadd.f32 %v561, %v257
  %v563 = vadd.f32 %v562, %v289
  %v564 = vrot.slane %v563, 4
  %v565 = vadd.f32 %v563, %v564
  %v566 = vrot.slane %v565, 2
  %v567 = vadd.f32 %v565, %v566
  %v568 = vrot.slane %v567, 1
  %v569 = vadd.f32 %v567, %v568
  %v570 = vadd.f32 %v194, %v226
  %v571 = vadd.f32 %v570, %v258
  %v572 = vadd.f32 %v571, %v290
  %v573 = vrot.slane %v572, 4
  %v574 = vadd.f32 %v572, %v573
  %v575 = vrot.slane %v574, 2
  %v576 = vadd.f32 %v574, %v575
  %v577 = vrot.slane %v576, 1
  %v578 = vadd.f32 %v576, %v577
  %v579 = vxor.u32 %v299, 2147483648
  %v580 = vxor.u32 %v308, 2147483648
  %v581 = vxor.u32 %v317, 2147483648
  %v582 = vxor.u32 %v326, 2147483648
  %v583 = vxor.u32 %v335, 2147483648
  %v584 = vxor.u32 %v344, 2147483648
  %v585 = vxor.u32 %v353, 2147483648
  %v586 = vxor.u32 %v362, 2147483648
  %v587 = vxor.u32 %v371, 2147483648
  %v588 = vxor.u32 %v380, 2147483648
  %v589 = vxor.u32 %v389, 2147483648
  %v590 = vxor.u32 %v398, 2147483648
  %v591 = vxor.u32 %v407, 2147483648
  %v592 = vxor.u32 %v416, 2147483648
  %v593 = vxor.u32 %v425, 2147483648
  %v594 = vxor.u32 %v434, 2147483648
  %v595 = vxor.u32 %v443, 2147483648
  %v596 = vxor.u32 %v452, 2147483648
  %v597 = vxor.u32 %v461, 2147483648
  %v598 = vxor.u32 %v470, 2147483648
  %v599 = vxor.u32 %v479, 2147483648
  %v600 = vxor.u32 %v488, 2147483648
  %v601 = vxor.u32 %v497, 2147483648
  %v602 = vxor.u32 %v506, 2147483648
  %v603 = vxor.u32 %v515, 2147483648
  %v604 = vxor.u32 %v524, 2147483648
  %v605 = vxor.u32 %v533, 2147483648
  %v606 = vxor.u32 %v542, 2147483648
  %v607 = vxor.u32 %v551, 2147483648
  %v608 = vxor.u32 %v560, 2147483648
  %v609 = vxor.u32 %v569, 2147483648
  %v610 = vxor.u32 %v578, 2147483648
  %v611 = vmul.f32 %v579, 1.442695
  %v612 = vpow.pop %v611
  %v613 = vmul.f32 %v580, 1.442695
  %v614 = vpow.pop %v613
  %v615 = vmul.f32 %v581, 1.442695
  %v616 = vpow.pop %v615
  %v617 = vmul.f32 %v582, 1.442695
  %v618 = vpow.pop %v617
  %v619 = vmul.f32 %v583, 1.442695
  %v620 = vpow.pop %v619
  %v621 = vmul.f32 %v584, 1.442695
  %v622 = vpow.pop %v621
  %v623 = vmul.f32 %v585, 1.442695
  %v624 = vpow.pop %v623
  %v625 = vmul.f32 %v586, 1.442695
  %v626 = vpow.pop %v625
  %v627 = vmul.f32 %v587, 1.442695
  %v628 = vpow.pop %v627
  %v629 = vmul.f32 %v588, 1.442695
  %v630 = vpow.pop %v629
  %v631 = vmul.f32 %v589, 1.442695
  %v632 = vpow.pop %v631
  %v633 = vmul.f32 %v590, 1.442695
  %v634 = vpow.pop %v633
  %v635 = vmul.f32 %v591, 1.442695
  %v636 = vpow.pop %v635
  %v637 = vmul.f32 %v592, 1.442695
  %v638 = vpow.pop %v637
  %v639 = vmul.f32 %v593, 1.442695
  %v640 = vpow.pop %v639
  %v641 = vmul.f32 %v594, 1.442695
  %v642 = vpow.pop %v641
  %v643 = vmul.f32 %v595, 1.442695
  %v644 = vpow.pop %v643
  %v645 = vmul.f32 %v596, 1.442695
  %v646 = vpow.pop %v645
  %v647 = vmul.f32 %v597, 1.442695
  %v648 = vpow.pop %v647
  %v649 = vmul.f32 %v598, 1.442695
  %v650 = vpow.pop %v649
  %v651 = vmul.f32 %v599, 1.442695
  %v652 = vpow.pop %v651
  %v653 = vmul.f32 %v600, 1.442695
  %v654 = vpow.pop %v653
  %v655 = vmul.f32 %v601, 1.442695
  %v656 = vpow.pop %v655
  %v657 = vmul.f32 %v602, 1.442695
  %v658 = vpow.pop %v657
  %v659 = vmul.f32 %v603, 1.442695
  %v660 = vpow.pop %v659
  %v661 = vmul.f32 %v604, 1.442695
  %v662 = vpow.pop %v661
  %v663 = vmul.f32 %v605, 1.442695
  %v664 = vpow.pop %v663
  %v665 = vmul.f32 %v606, 1.442695
  %v666 = vpow.pop %v665
  %v667 = vmul.f32 %v607, 1.442695
  %v668 = vpow.pop %v667
  %v669 = vmul.f32 %v608, 1.442695
  %v670 = vpow.pop %v669
  %v671 = vmul.f32 %v609, 1.442695
  %v672 = vpow.pop %v671
  %v673 = vmul.f32 %v610, 1.442695
  %v674 = vpow.pop %v673
  %v675 = vadd.f32 %v612, 1.0
  %v676 = vadd.f32 %v614, 1.0
  %v677 = vadd.f32 %v616, 1.0
  %v678 = vadd.f32 %v618, 1.0
  %v679 = vadd.f32 %v620, 1.0
  %v680 = vadd.f32 %v622, 1.0
  %v681 = vadd.f32 %v624, 1.0
  %v682 = vadd.f32 %v626, 1.0
  %v683 = vadd.f32 %v628, 1.0
  %v684 = vadd.f32 %v630, 1.0
  %v685 = vadd.f32 %v632, 1.0
  %v686 = vadd.f32 %v634, 1.0
  %v687 = vadd.f32 %v636, 1.0
  %v688 = vadd.f32 %v638, 1.0
  %v689 = vadd.f32 %v640, 1.0
  %v690 = vadd.f32 %v642, 1.0
  %v691 = vadd.f32 %v644, 1.0
  %v692 = vadd.f32 %v646, 1.0
  %v693 = vadd.f32 %v648, 1.0
  %v694 = vadd.f32 %v650, 1.0
  %v695 = vadd.f32 %v652, 1.0
  %v696 = vadd.f32 %v654, 1.0
  %v697 = vadd.f32 %v656, 1.0
  %v698 = vadd.f32 %v658, 1.0
  %v699 = vadd.f32 %v660, 1.0
  %v700 = vadd.f32 %v662, 1.0
  %v701 = vadd.f32 %v664, 1.0
  %v702 = vadd.f32 %v666, 1.0
  %v703 = vadd.f32 %v668, 1.0
  %v704 = vadd.f32 %v670, 1.0
  %v705 = vadd.f32 %v672, 1.0
  %v706 = vadd.f32 %v674, 1.0
  %v707 = vrcp.pop %v675
  %v708 = vmul.f32 1.0, %v707
  %v709 = vrcp.pop %v676
  %v710 = vmul.f32 1.0, %v709
  %v711 = vrcp.pop %v677
  %v712 = vmul.f32 1.0, %v711
  %v713 = vrcp.pop %v678
  %v714 = vmul.f32 1.0, %v713
  %v715 = vrcp.pop %v679
  %v716 = vmul.f32 1.0, %v715
  %v717 = vrcp.pop %v680
  %v718 = vmul.f32 1.0, %v717
  %v719 = vrcp.pop %v681
  %v720 = vmul.f32 1.0, %v719
  %v721 = vrcp.pop %v682
  %v722 = vmul.f32 1.0, %v721
  %v723 = vrcp.pop %v683
  %v724 = vmul.f32 1.0, %v723
  %v725 = vrcp.pop %v684
  %v726 = vmul.f32 1.0, %v725
  %v727 = vrcp.pop %v685
  %v728 = vmul.f32 1.0, %v727
  %v729 = vrcp.pop %v686
  %v730 = vmul.f32 1.0, %v729
  %v731 = vrcp.pop %v687
  %v732 = vmul.f32 1.0, %v731
  %v733 = vrcp.pop %v688
  %v734 = vmul.f32 1.0, %v733
  %v735 = vrcp.pop %v689
  %v736 = vmul.f32 1.0, %v735
  %v737 = vrcp.pop %v690
  %v738 = vmul.f32 1.0, %v737
  %v739 = vrcp.pop %v691
  %v740 = vmul.f32 1.0, %v739
  %v741 = vrcp.pop %v692
  %v742 = vmul.f32 1.0, %v741
  %v743 = vrcp.pop %v693
  %v744 = vmul.f32 1.0, %v743
  %v745 = vrcp.pop %v694
  %v746 = vmul.f32 1.0, %v745
  %v747 = vrcp.pop %v695
  %v748 = vmul.f32 1.0, %v747
  %v749 = vrcp.pop %v696
  %v750 = vmul.f32 1.0, %v749
  %v751 = vrcp.pop %v697
  %v752 = vmul.f32 1.0, %v751
  %v753 = vrcp.pop %v698
  %v754 = vmul.f32 1.0, %v753
  %v755 = vrcp.pop %v699
  %v756 = vmul.f32 1.0, %v755
  %v757 = vrcp.pop %v700
  %v758 = vmul.f32 1.0, %v757
  %v759 = vrcp.pop %v701
  %v760 = vmul.f32 1.0, %v759
  %v761 = vrcp.pop %v702
  %v762 = vmul.f32 1.0, %v761
  %v763 = vrcp.pop %v703
  %v764 = vmul.f32 1.0, %v763
  %v765 = vrcp.pop %v704
  %v766 = vmul.f32 1.0, %v765
  %v767 = vrcp.pop %v705
  %v768 = vmul.f32 1.0, %v767
  %v769 = vrcp.pop %v706
  %v770 = vmul.f32 1.0, %v769
  %v771 = vmul.f32 %v15, %v708
  %v772 = vmul.f32 %v16, %v710
  %v773 = vmul.f32 %v17, %v712
  %v774 = vmul.f32 %v18, %v714
  %v775 = vmul.f32 %v19, %v716
  %v776 = vmul.f32 %v20, %v718
  %v777 = vmul.f32 %v21, %v720
  %v778 = vmul.f32 %v22, %v722
  %v779 = vmul.f32 %v23, %v724
  %v780 = vmul.f32 %v24, %v726
  %v781 = vmul.f32 %v25, %v728
  %v782 = vmul.f32 %v26, %v730
  %v783 = vmul.f32 %v27, %v732
  %v784 = vmul.f32 %v28, %v734
  %v785 = vmul.f32 %v29, %v736
  %v786 = vmul.f32 %v30, %v738
  %v787 = vmul.f32 %v31, %v740
  %v788 = vmul.f32 %v32, %v742
  %v789 = vmul.f32 %v33, %v744
  %v790 = vmul.f32 %v34, %v746
  %v791 = vmul.f32 %v35, %v748
  %v792 = vmul.f32 %v36, %v750
  %v793 = vmul.f32 %v37, %v752
  %v794 = vmul.f32 %v38, %v754
  %v795 = vmul.f32 %v39, %v756
  %v796 = vmul.f32 %v40, %v758
  %v797 = vmul.f32 %v41, %v760
  %v798 = vmul.f32 %v42, %v762
  %v799 = vmul.f32 %v43, %v764
  %v800 = vmul.f32 %v44, %v766
  %v801 = vmul.f32 %v45, %v768
  %v802 = vmul.f32 %v46, %v770
  %v803 = vmul.f32 %v47, %v708
  %v804 = vmul.f32 %v48, %v710
  %v805 = vmul.f32 %v49, %v712
  %v806 = vmul.f32 %v50, %v714
  %v807 = vmul.f32 %v51, %v716
  %v808 = vmul.f32 %v52, %v718
  %v809 = vmul.f32 %v53, %v720
  %v810 = vmul.f32 %v54, %v722
  %v811 = vmul.f32 %v55, %v724
  %v812 = vmul.f32 %v56, %v726
  %v813 = vmul.f32 %v57, %v728
  %v814 = vmul.f32 %v58, %v730
  %v815 = vmul.f32 %v59, %v732
  %v816 = vmul.f32 %v60, %v734
  %v817 = vmul.f32 %v61, %v736
  %v818 = vmul.f32 %v62, %v738
  %v819 = vmul.f32 %v63, %v740
  %v820 = vmul.f32 %v64, %v742
  %v821 = vmul.f32 %v65, %v744
  %v822 = vmul.f32 %v66, %v746
  %v823 = vmul.f32 %v67, %v748
  %v824 = vmul.f32 %v68, %v750
  %v825 = vmul.f32 %v69, %v752
  %v826 = vmul.f32 %v70, %v754
  %v827 = vmul.f32 %v71, %v756
  %v828 = vmul.f32 %v72, %v758
  %v829 = vmul.f32 %v73, %v760
  %v830 = vmul.f32 %v74, %v762
  %v831 = vmul.f32 %v75, %v764
  %v832 = vmul.f32 %v76, %v766
  %v833 = vmul.f32 %v77, %v768
  %v834 = vmul.f32 %v78, %v770
  %v835 = vmul.f32 %v79, %v708
  %v836 = vmul.f32 %v80, %v710
  %v837 = vmul.f32 %v81, %v712
  %v838 = vmul.f32 %v82, %v714
  %v839 = vmul.f32 %v83, %v716
  %v840 = vmul.f32 %v84, %v718
  %v841 = vmul.f32 %v85, %v720
  %v842 = vmul.f32 %v86, %v722
  %v843 = vmul.f32 %v87, %v724
  %v844 = vmul.f32 %v88, %v726
  %v845 = vmul.f32 %v89, %v728
  %v846 = vmul.f32 %v90, %v730
  %v847 = vmul.f32 %v91, %v732
  %v848 = vmul.f32 %v92, %v734
  %v849 = vmul.f32 %v93, %v736
  %v850 = vmul.f32 %v94, %v738
  %v851 = vmul.f32 %v95, %v740
  %v852 = vmul.f32 %v96, %v742
  %v853 = vmul.f32 %v97, %v744
  %v854 = vmul.f32 %v98, %v746
  %v855 = vmul.f32 %v99, %v748
  %v856 = vmul.f32 %v100, %v750
  %v857 = vmul.f32 %v101, %v752
  %v858 = vmul.f32 %v102, %v754
  %v859 = vmul.f32 %v103, %v756
  %v860 = vmul.f32 %v104, %v758
  %v861 = vmul.f32 %v105, %v760
  %v862 = vmul.f32 %v106, %v762
  %v863 = vmul.f32 %v107, %v764
  %v864 = vmul.f32 %v108, %v766
  %v865 = vmul.f32 %v109, %v768
  %v866 = vmul.f32 %v110, %v770
  %v867 = vmul.f32 %v111, %v708
  %v868 = vmul.f32 %v112, %v710
  %v869 = vmul.f32 %v113, %v712
  %v870 = vmul.f32 %v114, %v714
  %v871 = vmul.f32 %v115, %v716
  %v872 = vmul.f32 %v116, %v718
  %v873 = vmul.f32 %v117, %v720
  %v874 = vmul.f32 %v118, %v722
  %v875 = vmul.f32 %v119, %v724
  %v876 = vmul.f32 %v120, %v726
  %v877 = vmul.f32 %v121, %v728
  %v878 = vmul.f32 %v122, %v730
  %v879 = vmul.f32 %v123, %v732
  %v880 = vmul.f32 %v124, %v734
  %v881 = vmul.f32 %v125, %v736
  %v882 = vmul.f32 %v126, %v738
  %v883 = vmul.f32 %v127, %v740
  %v884 = vmul.f32 %v128, %v742
  %v885 = vmul.f32 %v129, %v744
  %v886 = vmul.f32 %v130, %v746
  %v887 = vmul.f32 %v131, %v748
  %v888 = vmul.f32 %v132, %v750
  %v889 = vmul.f32 %v133, %v752
  %v890 = vmul.f32 %v134, %v754
  %v891 = vmul.f32 %v135, %v756
  %v892 = vmul.f32 %v136, %v758
  %v893 = vmul.f32 %v137, %v760
  %v894 = vmul.f32 %v138, %v762
  %v895 = vmul.f32 %v139, %v764
  %v896 = vmul.f32 %v140, %v766
  %v897 = vmul.f32 %v141, %v768
  %v898 = vmul.f32 %v142, %v770
  %899 = vst [vmem:[%s2] sm:$0xff] %v771
  %900 = vst [vmem:[%s2 + $0x8] sm:$0xff] %v772
  %901 = vst [vmem:[%s2 + $0x10] sm:$0xff] %v773
  %902 = vst [vmem:[%s2 + $0x18] sm:$0xff] %v774
  %903 = vst [vmem:[%s2 + $0x20] sm:$0xff] %v775
  %904 = vst [vmem:[%s2 + $0x28] sm:$0xff] %v776
  %905 = vst [vmem:[%s2 + $0x30] sm:$0xff] %v777
  %906 = vst [vmem:[%s2 + $0x38] sm:$0xff] %v778
  %907 = vst [vmem:[%s2 + $0x40] sm:$0xff] %v779
  %908 = vst [vmem:[%s2 + $0x48] sm:$0xff] %v780
  %909 = vst [vmem:[%s2 + $0x50] sm:$0xff] %v781
  %910 = vst [vmem:[%s2 + $0x58] sm:$0xff] %v782
  %911 = vst [vmem:[%s2 + $0x60] sm:$0xff] %v783
  %912 = vst [vmem:[%s2 + $0x68] sm:$0xff] %v784
  %913 = vst [vmem:[%s2 + $0x70] sm:$0xff] %v785
  %914 = vst [vmem:[%s2 + $0x78] sm:$0xff] %v786
  %915 = vst [vmem:[%s2 + $0x80] sm:$0xff] %v787
  %916 = vst [vmem:[%s2 + $0x88] sm:$0xff] %v788
  %917 = vst [vmem:[%s2 + $0x90] sm:$0xff] %v789
  %918 = vst [vmem:[%s2 + $0x98] sm:$0xff] %v790
  %919 = vst [vmem:[%s2 + $0xa0] sm:$0xff] %v791
  %920 = vst [vmem:[%s2 + $0xa8] sm:$0xff] %v792
  %921 = vst [vmem:[%s2 + $0xb0] sm:$0xff] %v793
  %922 = vst [vmem:[%s2 + $0xb8] sm:$0xff] %v794
  %923 = vst [vmem:[%s2 + $0xc0] sm:$0xff] %v795
  %924 = vst [vmem:[%s2 + $0xc8] sm:$0xff] %v796
  %925 = vst [vmem:[%s2 + $0xd0] sm:$0xff] %v797
  %926 = vst [vmem:[%s2 + $0xd8] sm:$0xff] %v798
  %927 = vst [vmem:[%s2 + $0xe0] sm:$0xff] %v799
  %928 = vst [vmem:[%s2 + $0xe8] sm:$0xff] %v800
  %929 = vst [vmem:[%s2 + $0xf0] sm:$0xff] %v801
  %930 = vst [vmem:[%s2 + $0xf8] sm:$0xff] %v802
  %931 = vst [vmem:[%s2 + $0x100] sm:$0xff] %v803
  %932 = vst [vmem:[%s2 + $0x108] sm:$0xff] %v804
  %933 = vst [vmem:[%s2 + $0x110] sm:$0xff] %v805
  %934 = vst [vmem:[%s2 + $0x118] sm:$0xff] %v806
  %935 = vst [vmem:[%s2 + $0x120] sm:$0xff] %v807
  %936 = vst [vmem:[%s2 + $0x128] sm:$0xff] %v808
  %937 = vst [vmem:[%s2 + $0x130] sm:$0xff] %v809
  %938 = vst [vmem:[%s2 + $0x138] sm:$0xff] %v810
  %939 = vst [vmem:[%s2 + $0x140] sm:$0xff] %v811
  %940 = vst [vmem:[%s2 + $0x148] sm:$0xff] %v812
  %941 = vst [vmem:[%s2 + $0x150] sm:$0xff] %v813
  %942 = vst [vmem:[%s2 + $0x158] sm:$0xff] %v814
  %943 = vst [vmem:[%s2 + $0x160] sm:$0xff] %v815
  %944 = vst [vmem:[%s2 + $0x168] sm:$0xff] %v816
  %945 = vst [vmem:[%s2 + $0x170] sm:$0xff] %v817
  %946 = vst [vmem:[%s2 + $0x178] sm:$0xff] %v818
  %947 = vst [vmem:[%s2 + $0x180] sm:$0xff] %v819
  %948 = vst [vmem:[%s2 + $0x188] sm:$0xff] %v820
  %949 = vst [vmem:[%s2 + $0x190] sm:$0xff] %v821
  %950 = vst [vmem:[%s2 + $0x198] sm:$0xff] %v822
  %951 = vst [vmem:[%s2 + $0x1a0] sm:$0xff] %v823
  %952 = vst [vmem:[%s2 + $0x1a8] sm:$0xff] %v824
  %953 = vst [vmem:[%s2 + $0x1b0] sm:$0xff] %v825
  %954 = vst [vmem:[%s2 + $0x1b8] sm:$0xff] %v826
  %955 = vst [vmem:[%s2 + $0x1c0] sm:$0xff] %v827
  %956 = vst [vmem:[%s2 + $0x1c8] sm:$0xff] %v828
  %957 = vst [vmem:[%s2 + $0x1d0] sm:$0xff] %v829
  %958 = vst [vmem:[%s2 + $0x1d8] sm:$0xff] %v830
  %959 = vst [vmem:[%s2 + $0x1e0] sm:$0xff] %v831
  %960 = vst [vmem:[%s2 + $0x1e8] sm:$0xff] %v832
  %961 = vst [vmem:[%s2 + $0x1f0] sm:$0xff] %v833
  %962 = vst [vmem:[%s2 + $0x1f8] sm:$0xff] %v834
  %963 = vst [vmem:[%s2 + $0x200] sm:$0xff] %v835
  %964 = vst [vmem:[%s2 + $0x208] sm:$0xff] %v836
  %965 = vst [vmem:[%s2 + $0x210] sm:$0xff] %v837
  %966 = vst [vmem:[%s2 + $0x218] sm:$0xff] %v838
  %967 = vst [vmem:[%s2 + $0x220] sm:$0xff] %v839
  %968 = vst [vmem:[%s2 + $0x228] sm:$0xff] %v840
  %969 = vst [vmem:[%s2 + $0x230] sm:$0xff] %v841
  %970 = vst [vmem:[%s2 + $0x238] sm:$0xff] %v842
  %971 = vst [vmem:[%s2 + $0x240] sm:$0xff] %v843
  %972 = vst [vmem:[%s2 + $0x248] sm:$0xff] %v844
  %973 = vst [vmem:[%s2 + $0x250] sm:$0xff] %v845
  %974 = vst [vmem:[%s2 + $0x258] sm:$0xff] %v846
  %975 = vst [vmem:[%s2 + $0x260] sm:$0xff] %v847
  %976 = vst [vmem:[%s2 + $0x268] sm:$0xff] %v848
  %977 = vst [vmem:[%s2 + $0x270] sm:$0xff] %v849
  %978 = vst [vmem:[%s2 + $0x278] sm:$0xff] %v850
  %979 = vst [vmem:[%s2 + $0x280] sm:$0xff] %v851
  %980 = vst [vmem:[%s2 + $0x288] sm:$0xff] %v852
  %981 = vst [vmem:[%s2 + $0x290] sm:$0xff] %v853
  %982 = vst [vmem:[%s2 + $0x298] sm:$0xff] %v854
  %983 = vst [vmem:[%s2 + $0x2a0] sm:$0xff] %v855
  %984 = vst [vmem:[%s2 + $0x2a8] sm:$0xff] %v856
  %985 = vst [vmem:[%s2 + $0x2b0] sm:$0xff] %v857
  %986 = vst [vmem:[%s2 + $0x2b8] sm:$0xff] %v858
  %987 = vst [vmem:[%s2 + $0x2c0] sm:$0xff] %v859
  %988 = vst [vmem:[%s2 + $0x2c8] sm:$0xff] %v860
  %989 = vst [vmem:[%s2 + $0x2d0] sm:$0xff] %v861
  %990 = vst [vmem:[%s2 + $0x2d8] sm:$0xff] %v862
  %991 = vst [vmem:[%s2 + $0x2e0] sm:$0xff] %v863
  %992 = vst [vmem:[%s2 + $0x2e8] sm:$0xff] %v864
  %993 = vst [vmem:[%s2 + $0x2f0] sm:$0xff] %v865
  %994 = vst [vmem:[%s2 + $0x2f8] sm:$0xff] %v866
  %995 = vst [vmem:[%s2 + $0x300] sm:$0xff] %v867
  %996 = vst [vmem:[%s2 + $0x308] sm:$0xff] %v868
  %997 = vst [vmem:[%s2 + $0x310] sm:$0xff] %v869
  %998 = vst [vmem:[%s2 + $0x318] sm:$0xff] %v870
  %999 = vst [vmem:[%s2 + $0x320] sm:$0xff] %v871
  %1000 = vst [vmem:[%s2 + $0x328] sm:$0xff] %v872
  %1001 = vst [vmem:[%s2 + $0x330] sm:$0xff] %v873
  %1002 = vst [vmem:[%s2 + $0x338] sm:$0xff] %v874
  %1003 = vst [vmem:[%s2 + $0x340] sm:$0xff] %v875
  %1004 = vst [vmem:[%s2 + $0x348] sm:$0xff] %v876
  %1005 = vst [vmem:[%s2 + $0x350] sm:$0xff] %v877
  %1006 = vst [vmem:[%s2 + $0x358] sm:$0xff] %v878
  %1007 = vst [vmem:[%s2 + $0x360] sm:$0xff] %v879
  %1008 = vst [vmem:[%s2 + $0x368] sm:$0xff] %v880
  %1009 = vst [vmem:[%s2 + $0x370] sm:$0xff] %v881
  %1010 = vst [vmem:[%s2 + $0x378] sm:$0xff] %v882
  %1011 = vst [vmem:[%s2 + $0x380] sm:$0xff] %v883
  %1012 = vst [vmem:[%s2 + $0x388] sm:$0xff] %v884
  %1013 = vst [vmem:[%s2 + $0x390] sm:$0xff] %v885
  %1014 = vst [vmem:[%s2 + $0x398] sm:$0xff] %v886
  %1015 = vst [vmem:[%s2 + $0x3a0] sm:$0xff] %v887
  %1016 = vst [vmem:[%s2 + $0x3a8] sm:$0xff] %v888
  %1017 = vst [vmem:[%s2 + $0x3b0] sm:$0xff] %v889
  %1018 = vst [vmem:[%s2 + $0x3b8] sm:$0xff] %v890
  %1019 = vst [vmem:[%s2 + $0x3c0] sm:$0xff] %v891
  %1020 = vst [vmem:[%s2 + $0x3c8] sm:$0xff] %v892
  %1021 = vst [vmem:[%s2 + $0x3d0] sm:$0xff] %v893
  %1022 = vst [vmem:[%s2 + $0x3d8] sm:$0xff] %v894
  %1023 = vst [vmem:[%s2 + $0x3e0] sm:$0xff] %v895
  %1024 = vst [vmem:[%s2 + $0x3e8] sm:$0xff] %v896
  %1025 = vst [vmem:[%s2 + $0x3f0] sm:$0xff] %v897
  %1026 = vst [vmem:[%s2 + $0x3f8] sm:$0xff] %v898
  %s1027 = scalar_lea.vmem %s0, 1024
  %v1028 = vld [vmem:[%s1027] sm:$0xff]
  %v1029 = vld [vmem:[%s1027 + $0x8] sm:$0xff]
  %v1030 = vld [vmem:[%s1027 + $0x10] sm:$0xff]
  %v1031 = vld [vmem:[%s1027 + $0x18] sm:$0xff]
  %v1032 = vld [vmem:[%s1027 + $0x20] sm:$0xff]
  %v1033 = vld [vmem:[%s1027 + $0x28] sm:$0xff]
  %v1034 = vld [vmem:[%s1027 + $0x30] sm:$0xff]
  %v1035 = vld [vmem:[%s1027 + $0x38] sm:$0xff]
  %v1036 = vld [vmem:[%s1027 + $0x40] sm:$0xff]
  %v1037 = vld [vmem:[%s1027 + $0x48] sm:$0xff]
  %v1038 = vld [vmem:[%s1027 + $0x50] sm:$0xff]
  %v1039 = vld [vmem:[%s1027 + $0x58] sm:$0xff]
  %v1040 = vld [vmem:[%s1027 + $0x60] sm:$0xff]
  %v1041 = vld [vmem:[%s1027 + $0x68] sm:$0xff]
  %v1042 = vld [vmem:[%s1027 + $0x70] sm:$0xff]
  %v1043 = vld [vmem:[%s1027 + $0x78] sm:$0xff]
  %v1044 = vld [vmem:[%s1027 + $0x80] sm:$0xff]
  %v1045 = vld [vmem:[%s1027 + $0x88] sm:$0xff]
  %v1046 = vld [vmem:[%s1027 + $0x90] sm:$0xff]
  %v1047 = vld [vmem:[%s1027 + $0x98] sm:$0xff]
  %v1048 = vld [vmem:[%s1027 + $0xa0] sm:$0xff]
  %v1049 = vld [vmem:[%s1027 + $0xa8] sm:$0xff]
  %v1050 = vld [vmem:[%s1027 + $0xb0] sm:$0xff]
  %v1051 = vld [vmem:[%s1027 + $0xb8] sm:$0xff]
  %v1052 = vld [vmem:[%s1027 + $0xc0] sm:$0xff]
  %v1053 = vld [vmem:[%s1027 + $0xc8] sm:$0xff]
  %v1054 = vld [vmem:[%s1027 + $0xd0] sm:$0xff]
  %v1055 = vld [vmem:[%s1027 + $0xd8] sm:$0xff]
  %v1056 = vld [vmem:[%s1027 + $0xe0] sm:$0xff]
  %v1057 = vld [vmem:[%s1027 + $0xe8] sm:$0xff]
  %v1058 = vld [vmem:[%s1027 + $0xf0] sm:$0xff]
  %v1059 = vld [vmem:[%s1027 + $0xf8] sm:$0xff]
  %v1060 = vld [vmem:[%s1027 + $0x100] sm:$0xff]
  %v1061 = vld [vmem:[%s1027 + $0x108] sm:$0xff]
  %v1062 = vld [vmem:[%s1027 + $0x110] sm:$0xff]
  %v1063 = vld [vmem:[%s1027 + $0x118] sm:$0xff]
  %v1064 = vld [vmem:[%s1027 + $0x120] sm:$0xff]
  %v1065 = vld [vmem:[%s1027 + $0x128] sm:$0xff]
  %v1066 = vld [vmem:[%s1027 + $0x130] sm:$0xff]
  %v1067 = vld [vmem:[%s1027 + $0x138] sm:$0xff]
  %v1068 = vld [vmem:[%s1027 + $0x140] sm:$0xff]
  %v1069 = vld [vmem:[%s1027 + $0x148] sm:$0xff]
  %v1070 = vld [vmem:[%s1027 + $0x150] sm:$0xff]
  %v1071 = vld [vmem:[%s1027 + $0x158] sm:$0xff]
  %v1072 = vld [vmem:[%s1027 + $0x160] sm:$0xff]
  %v1073 = vld [vmem:[%s1027 + $0x168] sm:$0xff]
  %v1074 = vld [vmem:[%s1027 + $0x170] sm:$0xff]
  %v1075 = vld [vmem:[%s1027 + $0x178] sm:$0xff]
  %v1076 = vld [vmem:[%s1027 + $0x180] sm:$0xff]
  %v1077 = vld [vmem:[%s1027 + $0x188] sm:$0xff]
  %v1078 = vld [vmem:[%s1027 + $0x190] sm:$0xff]
  %v1079 = vld [vmem:[%s1027 + $0x198] sm:$0xff]
  %v1080 = vld [vmem:[%s1027 + $0x1a0] sm:$0xff]
  %v1081 = vld [vmem:[%s1027 + $0x1a8] sm:$0xff]
  %v1082 = vld [vmem:[%s1027 + $0x1b0] sm:$0xff]
  %v1083 = vld [vmem:[%s1027 + $0x1b8] sm:$0xff]
  %v1084 = vld [vmem:[%s1027 + $0x1c0] sm:$0xff]
  %v1085 = vld [vmem:[%s1027 + $0x1c8] sm:$0xff]
  %v1086 = vld [vmem:[%s1027 + $0x1d0] sm:$0xff]
  %v1087 = vld [vmem:[%s1027 + $0x1d8] sm:$0xff]
  %v1088 = vld [vmem:[%s1027 + $0x1e0] sm:$0xff]
  %v1089 = vld [vmem:[%s1027 + $0x1e8] sm:$0xff]
  %v1090 = vld [vmem:[%s1027 + $0x1f0] sm:$0xff]
  %v1091 = vld [vmem:[%s1027 + $0x1f8] sm:$0xff]
  %v1092 = vld [vmem:[%s1027 + $0x200] sm:$0xff]
  %v1093 = vld [vmem:[%s1027 + $0x208] sm:$0xff]
  %v1094 = vld [vmem:[%s1027 + $0x210] sm:$0xff]
  %v1095 = vld [vmem:[%s1027 + $0x218] sm:$0xff]
  %v1096 = vld [vmem:[%s1027 + $0x220] sm:$0xff]
  %v1097 = vld [vmem:[%s1027 + $0x228] sm:$0xff]
  %v1098 = vld [vmem:[%s1027 + $0x230] sm:$0xff]
  %v1099 = vld [vmem:[%s1027 + $0x238] sm:$0xff]
  %v1100 = vld [vmem:[%s1027 + $0x240] sm:$0xff]
  %v1101 = vld [vmem:[%s1027 + $0x248] sm:$0xff]
  %v1102 = vld [vmem:[%s1027 + $0x250] sm:$0xff]
  %v1103 = vld [vmem:[%s1027 + $0x258] sm:$0xff]
  %v1104 = vld [vmem:[%s1027 + $0x260] sm:$0xff]
  %v1105 = vld [vmem:[%s1027 + $0x268] sm:$0xff]
  %v1106 = vld [vmem:[%s1027 + $0x270] sm:$0xff]
  %v1107 = vld [vmem:[%s1027 + $0x278] sm:$0xff]
  %v1108 = vld [vmem:[%s1027 + $0x280] sm:$0xff]
  %v1109 = vld [vmem:[%s1027 + $0x288] sm:$0xff]
  %v1110 = vld [vmem:[%s1027 + $0x290] sm:$0xff]
  %v1111 = vld [vmem:[%s1027 + $0x298] sm:$0xff]
  %v1112 = vld [vmem:[%s1027 + $0x2a0] sm:$0xff]
  %v1113 = vld [vmem:[%s1027 + $0x2a8] sm:$0xff]
  %v1114 = vld [vmem:[%s1027 + $0x2b0] sm:$0xff]
  %v1115 = vld [vmem:[%s1027 + $0x2b8] sm:$0xff]
  %v1116 = vld [vmem:[%s1027 + $0x2c0] sm:$0xff]
  %v1117 = vld [vmem:[%s1027 + $0x2c8] sm:$0xff]
  %v1118 = vld [vmem:[%s1027 + $0x2d0] sm:$0xff]
  %v1119 = vld [vmem:[%s1027 + $0x2d8] sm:$0xff]
  %v1120 = vld [vmem:[%s1027 + $0x2e0] sm:$0xff]
  %v1121 = vld [vmem:[%s1027 + $0x2e8] sm:$0xff]
  %v1122 = vld [vmem:[%s1027 + $0x2f0] sm:$0xff]
  %v1123 = vld [vmem:[%s1027 + $0x2f8] sm:$0xff]
  %v1124 = vld [vmem:[%s1027 + $0x300] sm:$0xff]
  %v1125 = vld [vmem:[%s1027 + $0x308] sm:$0xff]
  %v1126 = vld [vmem:[%s1027 + $0x310] sm:$0xff]
  %v1127 = vld [vmem:[%s1027 + $0x318] sm:$0xff]
  %v1128 = vld [vmem:[%s1027 + $0x320] sm:$0xff]
  %v1129 = vld [vmem:[%s1027 + $0x328] sm:$0xff]
  %v1130 = vld [vmem:[%s1027 + $0x330] sm:$0xff]
  %v1131 = vld [vmem:[%s1027 + $0x338] sm:$0xff]
  %v1132 = vld [vmem:[%s1027 + $0x340] sm:$0xff]
  %v1133 = vld [vmem:[%s1027 + $0x348] sm:$0xff]
  %v1134 = vld [vmem:[%s1027 + $0x350] sm:$0xff]
  %v1135 = vld [vmem:[%s1027 + $0x358] sm:$0xff]
  %v1136 = vld [vmem:[%s1027 + $0x360] sm:$0xff]
  %v1137 = vld [vmem:[%s1027 + $0x368] sm:$0xff]
  %v1138 = vld [vmem:[%s1027 + $0x370] sm:$0xff]
  %v1139 = vld [vmem:[%s1027 + $0x378] sm:$0xff]
  %v1140 = vld [vmem:[%s1027 + $0x380] sm:$0xff]
  %v1141 = vld [vmem:[%s1027 + $0x388] sm:$0xff]
  %v1142 = vld [vmem:[%s1027 + $0x390] sm:$0xff]
  %v1143 = vld [vmem:[%s1027 + $0x398] sm:$0xff]
  %v1144 = vld [vmem:[%s1027 + $0x3a0] sm:$0xff]
  %v1145 = vld [vmem:[%s1027 + $0x3a8] sm:$0xff]
  %v1146 = vld [vmem:[%s1027 + $0x3b0] sm:$0xff]
  %v1147 = vld [vmem:[%s1027 + $0x3b8] sm:$0xff]
  %v1148 = vld [vmem:[%s1027 + $0x3c0] sm:$0xff]
  %v1149 = vld [vmem:[%s1027 + $0x3c8] sm:$0xff]
  %v1150 = vld [vmem:[%s1027 + $0x3d0] sm:$0xff]
  %v1151 = vld [vmem:[%s1027 + $0x3d8] sm:$0xff]
  %v1152 = vld [vmem:[%s1027 + $0x3e0] sm:$0xff]
  %v1153 = vld [vmem:[%s1027 + $0x3e8] sm:$0xff]
  %v1154 = vld [vmem:[%s1027 + $0x3f0] sm:$0xff]
  %v1155 = vld [vmem:[%s1027 + $0x3f8] sm:$0xff]
  %v1156 = vmul.f32 %v1028, %v146
  %v1157 = vmul.f32 %v1029, %v146
  %v1158 = vmul.f32 %v1030, %v146
  %v1159 = vmul.f32 %v1031, %v146
  %v1160 = vmul.f32 %v1032, %v146
  %v1161 = vmul.f32 %v1033, %v146
  %v1162 = vmul.f32 %v1034, %v146
  %v1163 = vmul.f32 %v1035, %v146
  %v1164 = vmul.f32 %v1036, %v146
  %v1165 = vmul.f32 %v1037, %v146
  %v1166 = vmul.f32 %v1038, %v146
  %v1167 = vmul.f32 %v1039, %v146
  %v1168 = vmul.f32 %v1040, %v146
  %v1169 = vmul.f32 %v1041, %v146
  %v1170 = vmul.f32 %v1042, %v146
  %v1171 = vmul.f32 %v1043, %v146
  %v1172 = vmul.f32 %v1044, %v146
  %v1173 = vmul.f32 %v1045, %v146
  %v1174 = vmul.f32 %v1046, %v146
  %v1175 = vmul.f32 %v1047, %v146
  %v1176 = vmul.f32 %v1048, %v146
  %v1177 = vmul.f32 %v1049, %v146
  %v1178 = vmul.f32 %v1050, %v146
  %v1179 = vmul.f32 %v1051, %v146
  %v1180 = vmul.f32 %v1052, %v146
  %v1181 = vmul.f32 %v1053, %v146
  %v1182 = vmul.f32 %v1054, %v146
  %v1183 = vmul.f32 %v1055, %v146
  %v1184 = vmul.f32 %v1056, %v146
  %v1185 = vmul.f32 %v1057, %v146
  %v1186 = vmul.f32 %v1058, %v146
  %v1187 = vmul.f32 %v1059, %v146
  %v1188 = vmul.f32 %v1060, %v151
  %v1189 = vmul.f32 %v1061, %v151
  %v1190 = vmul.f32 %v1062, %v151
  %v1191 = vmul.f32 %v1063, %v151
  %v1192 = vmul.f32 %v1064, %v151
  %v1193 = vmul.f32 %v1065, %v151
  %v1194 = vmul.f32 %v1066, %v151
  %v1195 = vmul.f32 %v1067, %v151
  %v1196 = vmul.f32 %v1068, %v151
  %v1197 = vmul.f32 %v1069, %v151
  %v1198 = vmul.f32 %v1070, %v151
  %v1199 = vmul.f32 %v1071, %v151
  %v1200 = vmul.f32 %v1072, %v151
  %v1201 = vmul.f32 %v1073, %v151
  %v1202 = vmul.f32 %v1074, %v151
  %v1203 = vmul.f32 %v1075, %v151
  %v1204 = vmul.f32 %v1076, %v151
  %v1205 = vmul.f32 %v1077, %v151
  %v1206 = vmul.f32 %v1078, %v151
  %v1207 = vmul.f32 %v1079, %v151
  %v1208 = vmul.f32 %v1080, %v151
  %v1209 = vmul.f32 %v1081, %v151
  %v1210 = vmul.f32 %v1082, %v151
  %v1211 = vmul.f32 %v1083, %v151
  %v1212 = vmul.f32 %v1084, %v151
  %v1213 = vmul.f32 %v1085, %v151
  %v1214 = vmul.f32 %v1086, %v151
  %v1215 = vmul.f32 %v1087, %v151
  %v1216 = vmul.f32 %v1088, %v151
  %v1217 = vmul.f32 %v1089, %v151
  %v1218 = vmul.f32 %v1090, %v151
  %v1219 = vmul.f32 %v1091, %v151
  %v1220 = vmul.f32 %v1092, %v156
  %v1221 = vmul.f32 %v1093, %v156
  %v1222 = vmul.f32 %v1094, %v156
  %v1223 = vmul.f32 %v1095, %v156
  %v1224 = vmul.f32 %v1096, %v156
  %v1225 = vmul.f32 %v1097, %v156
  %v1226 = vmul.f32 %v1098, %v156
  %v1227 = vmul.f32 %v1099, %v156
  %v1228 = vmul.f32 %v1100, %v156
  %v1229 = vmul.f32 %v1101, %v156
  %v1230 = vmul.f32 %v1102, %v156
  %v1231 = vmul.f32 %v1103, %v156
  %v1232 = vmul.f32 %v1104, %v156
  %v1233 = vmul.f32 %v1105, %v156
  %v1234 = vmul.f32 %v1106, %v156
  %v1235 = vmul.f32 %v1107, %v156
  %v1236 = vmul.f32 %v1108, %v156
  %v1237 = vmul.f32 %v1109, %v156
  %v1238 = vmul.f32 %v1110, %v156
  %v1239 = vmul.f32 %v1111, %v156
  %v1240 = vmul.f32 %v1112, %v156
  %v1241 = vmul.f32 %v1113, %v156
  %v1242 = vmul.f32 %v1114, %v156
  %v1243 = vmul.f32 %v1115, %v156
  %v1244 = vmul.f32 %v1116, %v156
  %v1245 = vmul.f32 %v1117, %v156
  %v1246 = vmul.f32 %v1118, %v156
  %v1247 = vmul.f32 %v1119, %v156
  %v1248 = vmul.f32 %v1120, %v156
  %v1249 = vmul.f32 %v1121, %v156
  %v1250 = vmul.f32 %v1122, %v156
  %v1251 = vmul.f32 %v1123, %v156
  %v1252 = vmul.f32 %v1124, %v161
  %v1253 = vmul.f32 %v1125, %v161
  %v1254 = vmul.f32 %v1126, %v161
  %v1255 = vmul.f32 %v1127, %v161
  %v1256 = vmul.f32 %v1128, %v161
  %v1257 = vmul.f32 %v1129, %v161
  %v1258 = vmul.f32 %v1130, %v161
  %v1259 = vmul.f32 %v1131, %v161
  %v1260 = vmul.f32 %v1132, %v161
  %v1261 = vmul.f32 %v1133, %v161
  %v1262 = vmul.f32 %v1134, %v161
  %v1263 = vmul.f32 %v1135, %v161
  %v1264 = vmul.f32 %v1136, %v161
  %v1265 = vmul.f32 %v1137, %v161
  %v1266 = vmul.f32 %v1138, %v161
  %v1267 = vmul.f32 %v1139, %v161
  %v1268 = vmul.f32 %v1140, %v161
  %v1269 = vmul.f32 %v1141, %v161
  %v1270 = vmul.f32 %v1142, %v161
  %v1271 = vmul.f32 %v1143, %v161
  %v1272 = vmul.f32 %v1144, %v161
  %v1273 = vmul.f32 %v1145, %v161
  %v1274 = vmul.f32 %v1146, %v161
  %v1275 = vmul.f32 %v1147, %v161
  %v1276 = vmul.f32 %v1148, %v161
  %v1277 = vmul.f32 %v1149, %v161
  %v1278 = vmul.f32 %v1150, %v161
  %v1279 = vmul.f32 %v1151, %v161
  %v1280 = vmul.f32 %v1152, %v161
  %v1281 = vmul.f32 %v1153, %v161
  %v1282 = vmul.f32 %v1154, %v161
  %v1283 = vmul.f32 %v1155, %v161
  %v1284 = vadd.f32 %v1156, %v1188
  %v1285 = vadd.f32 %v1284, %v1220
  %v1286 = vadd.f32 %v1285, %v1252
  %v1287 = vrot.slane %v1286, 4
  %v1288 = vadd.f32 %v1286, %v1287
  %v1289 = vrot.slane %v1288, 2
  %v1290 = vadd.f32 %v1288, %v1289
  %v1291 = vrot.slane %v1290, 1
  %v1292 = vadd.f32 %v1290, %v1291
  %v1293 = vadd.f32 %v1157, %v1189
  %v1294 = vadd.f32 %v1293, %v1221
  %v1295 = vadd.f32 %v1294, %v1253
  %v1296 = vrot.slane %v1295, 4
  %v1297 = vadd.f32 %v1295, %v1296
  %v1298 = vrot.slane %v1297, 2
  %v1299 = vadd.f32 %v1297, %v1298
  %v1300 = vrot.slane %v1299, 1
  %v1301 = vadd.f32 %v1299, %v1300
  %v1302 = vadd.f32 %v1158, %v1190
  %v1303 = vadd.f32 %v1302, %v1222
  %v1304 = vadd.f32 %v1303, %v1254
  %v1305 = vrot.slane %v1304, 4
  %v1306 = vadd.f32 %v1304, %v1305
  %v1307 = vrot.slane %v1306, 2
  %v1308 = vadd.f32 %v1306, %v1307
  %v1309 = vrot.slane %v1308, 1
  %v1310 = vadd.f32 %v1308, %v1309
  %v1311 = vadd.f32 %v1159, %v1191
  %v1312 = vadd.f32 %v1311, %v1223
  %v1313 = vadd.f32 %v1312, %v1255
  %v1314 = vrot.slane %v1313, 4
  %v1315 = vadd.f32 %v1313, %v1314
  %v1316 = vrot.slane %v1315, 2
  %v1317 = vadd.f32 %v1315, %v1316
  %v1318 = vrot.slane %v1317, 1
  %v1319 = vadd.f32 %v1317, %v1318
  %v1320 = vadd.f32 %v1160, %v1192
  %v1321 = vadd.f32 %v1320, %v1224
  %v1322 = vadd.f32 %v1321, %v1256
  %v1323 = vrot.slane %v1322, 4
  %v1324 = vadd.f32 %v1322, %v1323
  %v1325 = vrot.slane %v1324, 2
  %v1326 = vadd.f32 %v1324, %v1325
  %v1327 = vrot.slane %v1326, 1
  %v1328 = vadd.f32 %v1326, %v1327
  %v1329 = vadd.f32 %v1161, %v1193
  %v1330 = vadd.f32 %v1329, %v1225
  %v1331 = vadd.f32 %v1330, %v1257
  %v1332 = vrot.slane %v1331, 4
  %v1333 = vadd.f32 %v1331, %v1332
  %v1334 = vrot.slane %v1333, 2
  %v1335 = vadd.f32 %v1333, %v1334
  %v1336 = vrot.slane %v1335, 1
  %v1337 = vadd.f32 %v1335, %v1336
  %v1338 = vadd.f32 %v1162, %v1194
  %v1339 = vadd.f32 %v1338, %v1226
  %v1340 = vadd.f32 %v1339, %v1258
  %v1341 = vrot.slane %v1340, 4
  %v1342 = vadd.f32 %v1340, %v1341
  %v1343 = vrot.slane %v1342, 2
  %v1344 = vadd.f32 %v1342, %v1343
  %v1345 = vrot.slane %v1344, 1
  %v1346 = vadd.f32 %v1344, %v1345
  %v1347 = vadd.f32 %v1163, %v1195
  %v1348 = vadd.f32 %v1347, %v1227
  %v1349 = vadd.f32 %v1348, %v1259
  %v1350 = vrot.slane %v1349, 4
  %v1351 = vadd.f32 %v1349, %v1350
  %v1352 = vrot.slane %v1351, 2
  %v1353 = vadd.f32 %v1351, %v1352
  %v1354 = vrot.slane %v1353, 1
  %v1355 = vadd.f32 %v1353, %v1354
  %v1356 = vadd.f32 %v1164, %v1196
  %v1357 = vadd.f32 %v1356, %v1228
  %v1358 = vadd.f32 %v1357, %v1260
  %v1359 = vrot.slane %v1358, 4
  %v1360 = vadd.f32 %v1358, %v1359
  %v1361 = vrot.slane %v1360, 2
  %v1362 = vadd.f32 %v1360, %v1361
  %v1363 = vrot.slane %v1362, 1
  %v1364 = vadd.f32 %v1362, %v1363
  %v1365 = vadd.f32 %v1165, %v1197
  %v1366 = vadd.f32 %v1365, %v1229
  %v1367 = vadd.f32 %v1366, %v1261
  %v1368 = vrot.slane %v1367, 4
  %v1369 = vadd.f32 %v1367, %v1368
  %v1370 = vrot.slane %v1369, 2
  %v1371 = vadd.f32 %v1369, %v1370
  %v1372 = vrot.slane %v1371, 1
  %v1373 = vadd.f32 %v1371, %v1372
  %v1374 = vadd.f32 %v1166, %v1198
  %v1375 = vadd.f32 %v1374, %v1230
  %v1376 = vadd.f32 %v1375, %v1262
  %v1377 = vrot.slane %v1376, 4
  %v1378 = vadd.f32 %v1376, %v1377
  %v1379 = vrot.slane %v1378, 2
  %v1380 = vadd.f32 %v1378, %v1379
  %v1381 = vrot.slane %v1380, 1
  %v1382 = vadd.f32 %v1380, %v1381
  %v1383 = vadd.f32 %v1167, %v1199
  %v1384 = vadd.f32 %v1383, %v1231
  %v1385 = vadd.f32 %v1384, %v1263
  %v1386 = vrot.slane %v1385, 4
  %v1387 = vadd.f32 %v1385, %v1386
  %v1388 = vrot.slane %v1387, 2
  %v1389 = vadd.f32 %v1387, %v1388
  %v1390 = vrot.slane %v1389, 1
  %v1391 = vadd.f32 %v1389, %v1390
  %v1392 = vadd.f32 %v1168, %v1200
  %v1393 = vadd.f32 %v1392, %v1232
  %v1394 = vadd.f32 %v1393, %v1264
  %v1395 = vrot.slane %v1394, 4
  %v1396 = vadd.f32 %v1394, %v1395
  %v1397 = vrot.slane %v1396, 2
  %v1398 = vadd.f32 %v1396, %v1397
  %v1399 = vrot.slane %v1398, 1
  %v1400 = vadd.f32 %v1398, %v1399
  %v1401 = vadd.f32 %v1169, %v1201
  %v1402 = vadd.f32 %v1401, %v1233
  %v1403 = vadd.f32 %v1402, %v1265
  %v1404 = vrot.slane %v1403, 4
  %v1405 = vadd.f32 %v1403, %v1404
  %v1406 = vrot.slane %v1405, 2
  %v1407 = vadd.f32 %v1405, %v1406
  %v1408 = vrot.slane %v1407, 1
  %v1409 = vadd.f32 %v1407, %v1408
  %v1410 = vadd.f32 %v1170, %v1202
  %v1411 = vadd.f32 %v1410, %v1234
  %v1412 = vadd.f32 %v1411, %v1266
  %v1413 = vrot.slane %v1412, 4
  %v1414 = vadd.f32 %v1412, %v1413
  %v1415 = vrot.slane %v1414, 2
  %v1416 = vadd.f32 %v1414, %v1415
  %v1417 = vrot.slane %v1416, 1
  %v1418 = vadd.f32 %v1416, %v1417
  %v1419 = vadd.f32 %v1171, %v1203
  %v1420 = vadd.f32 %v1419, %v1235
  %v1421 = vadd.f32 %v1420, %v1267
  %v1422 = vrot.slane %v1421, 4
  %v1423 = vadd.f32 %v1421, %v1422
  %v1424 = vrot.slane %v1423, 2
  %v1425 = vadd.f32 %v1423, %v1424
  %v1426 = vrot.slane %v1425, 1
  %v1427 = vadd.f32 %v1425, %v1426
  %v1428 = vadd.f32 %v1172, %v1204
  %v1429 = vadd.f32 %v1428, %v1236
  %v1430 = vadd.f32 %v1429, %v1268
  %v1431 = vrot.slane %v1430, 4
  %v1432 = vadd.f32 %v1430, %v1431
  %v1433 = vrot.slane %v1432, 2
  %v1434 = vadd.f32 %v1432, %v1433
  %v1435 = vrot.slane %v1434, 1
  %v1436 = vadd.f32 %v1434, %v1435
  %v1437 = vadd.f32 %v1173, %v1205
  %v1438 = vadd.f32 %v1437, %v1237
  %v1439 = vadd.f32 %v1438, %v1269
  %v1440 = vrot.slane %v1439, 4
  %v1441 = vadd.f32 %v1439, %v1440
  %v1442 = vrot.slane %v1441, 2
  %v1443 = vadd.f32 %v1441, %v1442
  %v1444 = vrot.slane %v1443, 1
  %v1445 = vadd.f32 %v1443, %v1444
  %v1446 = vadd.f32 %v1174, %v1206
  %v1447 = vadd.f32 %v1446, %v1238
  %v1448 = vadd.f32 %v1447, %v1270
  %v1449 = vrot.slane %v1448, 4
  %v1450 = vadd.f32 %v1448, %v1449
  %v1451 = vrot.slane %v1450, 2
  %v1452 = vadd.f32 %v1450, %v1451
  %v1453 = vrot.slane %v1452, 1
  %v1454 = vadd.f32 %v1452, %v1453
  %v1455 = vadd.f32 %v1175, %v1207
  %v1456 = vadd.f32 %v1455, %v1239
  %v1457 = vadd.f32 %v1456, %v1271
  %v1458 = vrot.slane %v1457, 4
  %v1459 = vadd.f32 %v1457, %v1458
  %v1460 = vrot.slane %v1459, 2
  %v1461 = vadd.f32 %v1459, %v1460
  %v1462 = vrot.slane %v1461, 1
  %v1463 = vadd.f32 %v1461, %v1462
  %v1464 = vadd.f32 %v1176, %v1208
  %v1465 = vadd.f32 %v1464, %v1240
  %v1466 = vadd.f32 %v1465, %v1272
  %v1467 = vrot.slane %v1466, 4
  %v1468 = vadd.f32 %v1466, %v1467
  %v1469 = vrot.slane %v1468, 2
  %v1470 = vadd.f32 %v1468, %v1469
  %v1471 = vrot.slane %v1470, 1
  %v1472 = vadd.f32 %v1470, %v1471
  %v1473 = vadd.f32 %v1177, %v1209
  %v1474 = vadd.f32 %v1473, %v1241
  %v1475 = vadd.f32 %v1474, %v1273
  %v1476 = vrot.slane %v1475, 4
  %v1477 = vadd.f32 %v1475, %v1476
  %v1478 = vrot.slane %v1477, 2
  %v1479 = vadd.f32 %v1477, %v1478
  %v1480 = vrot.slane %v1479, 1
  %v1481 = vadd.f32 %v1479, %v1480
  %v1482 = vadd.f32 %v1178, %v1210
  %v1483 = vadd.f32 %v1482, %v1242
  %v1484 = vadd.f32 %v1483, %v1274
  %v1485 = vrot.slane %v1484, 4
  %v1486 = vadd.f32 %v1484, %v1485
  %v1487 = vrot.slane %v1486, 2
  %v1488 = vadd.f32 %v1486, %v1487
  %v1489 = vrot.slane %v1488, 1
  %v1490 = vadd.f32 %v1488, %v1489
  %v1491 = vadd.f32 %v1179, %v1211
  %v1492 = vadd.f32 %v1491, %v1243
  %v1493 = vadd.f32 %v1492, %v1275
  %v1494 = vrot.slane %v1493, 4
  %v1495 = vadd.f32 %v1493, %v1494
  %v1496 = vrot.slane %v1495, 2
  %v1497 = vadd.f32 %v1495, %v1496
  %v1498 = vrot.slane %v1497, 1
  %v1499 = vadd.f32 %v1497, %v1498
  %v1500 = vadd.f32 %v1180, %v1212
  %v1501 = vadd.f32 %v1500, %v1244
  %v1502 = vadd.f32 %v1501, %v1276
  %v1503 = vrot.slane %v1502, 4
  %v1504 = vadd.f32 %v1502, %v1503
  %v1505 = vrot.slane %v1504, 2
  %v1506 = vadd.f32 %v1504, %v1505
  %v1507 = vrot.slane %v1506, 1
  %v1508 = vadd.f32 %v1506, %v1507
  %v1509 = vadd.f32 %v1181, %v1213
  %v1510 = vadd.f32 %v1509, %v1245
  %v1511 = vadd.f32 %v1510, %v1277
  %v1512 = vrot.slane %v1511, 4
  %v1513 = vadd.f32 %v1511, %v1512
  %v1514 = vrot.slane %v1513, 2
  %v1515 = vadd.f32 %v1513, %v1514
  %v1516 = vrot.slane %v1515, 1
  %v1517 = vadd.f32 %v1515, %v1516
  %v1518 = vadd.f32 %v1182, %v1214
  %v1519 = vadd.f32 %v1518, %v1246
  %v1520 = vadd.f32 %v1519, %v1278
  %v1521 = vrot.slane %v1520, 4
  %v1522 = vadd.f32 %v1520, %v1521
  %v1523 = vrot.slane %v1522, 2
  %v1524 = vadd.f32 %v1522, %v1523
  %v1525 = vrot.slane %v1524, 1
  %v1526 = vadd.f32 %v1524, %v1525
  %v1527 = vadd.f32 %v1183, %v1215
  %v1528 = vadd.f32 %v1527, %v1247
  %v1529 = vadd.f32 %v1528, %v1279
  %v1530 = vrot.slane %v1529, 4
  %v1531 = vadd.f32 %v1529, %v1530
  %v1532 = vrot.slane %v1531, 2
  %v1533 = vadd.f32 %v1531, %v1532
  %v1534 = vrot.slane %v1533, 1
  %v1535 = vadd.f32 %v1533, %v1534
  %v1536 = vadd.f32 %v1184, %v1216
  %v1537 = vadd.f32 %v1536, %v1248
  %v1538 = vadd.f32 %v1537, %v1280
  %v1539 = vrot.slane %v1538, 4
  %v1540 = vadd.f32 %v1538, %v1539
  %v1541 = vrot.slane %v1540, 2
  %v1542 = vadd.f32 %v1540, %v1541
  %v1543 = vrot.slane %v1542, 1
  %v1544 = vadd.f32 %v1542, %v1543
  %v1545 = vadd.f32 %v1185, %v1217
  %v1546 = vadd.f32 %v1545, %v1249
  %v1547 = vadd.f32 %v1546, %v1281
  %v1548 = vrot.slane %v1547, 4
  %v1549 = vadd.f32 %v1547, %v1548
  %v1550 = vrot.slane %v1549, 2
  %v1551 = vadd.f32 %v1549, %v1550
  %v1552 = vrot.slane %v1551, 1
  %v1553 = vadd.f32 %v1551, %v1552
  %v1554 = vadd.f32 %v1186, %v1218
  %v1555 = vadd.f32 %v1554, %v1250
  %v1556 = vadd.f32 %v1555, %v1282
  %v1557 = vrot.slane %v1556, 4
  %v1558 = vadd.f32 %v1556, %v1557
  %v1559 = vrot.slane %v1558, 2
  %v1560 = vadd.f32 %v1558, %v1559
  %v1561 = vrot.slane %v1560, 1
  %v1562 = vadd.f32 %v1560, %v1561
  %v1563 = vadd.f32 %v1187, %v1219
  %v1564 = vadd.f32 %v1563, %v1251
  %v1565 = vadd.f32 %v1564, %v1283
  %v1566 = vrot.slane %v1565, 4
  %v1567 = vadd.f32 %v1565, %v1566
  %v1568 = vrot.slane %v1567, 2
  %v1569 = vadd.f32 %v1567, %v1568
  %v1570 = vrot.slane %v1569, 1
  %v1571 = vadd.f32 %v1569, %v1570
  %v1572 = vxor.u32 %v1292, 2147483648
  %v1573 = vxor.u32 %v1301, 2147483648
  %v1574 = vxor.u32 %v1310, 2147483648
  %v1575 = vxor.u32 %v1319, 2147483648
  %v1576 = vxor.u32 %v1328, 2147483648
  %v1577 = vxor.u32 %v1337, 2147483648
  %v1578 = vxor.u32 %v1346, 2147483648
  %v1579 = vxor.u32 %v1355, 2147483648
  %v1580 = vxor.u32 %v1364, 2147483648
  %v1581 = vxor.u32 %v1373, 2147483648
  %v1582 = vxor.u32 %v1382, 2147483648
  %v1583 = vxor.u32 %v1391, 2147483648
  %v1584 = vxor.u32 %v1400, 2147483648
  %v1585 = vxor.u32 %v1409, 2147483648
  %v1586 = vxor.u32 %v1418, 2147483648
  %v1587 = vxor.u32 %v1427, 2147483648
  %v1588 = vxor.u32 %v1436, 2147483648
  %v1589 = vxor.u32 %v1445, 2147483648
  %v1590 = vxor.u32 %v1454, 2147483648
  %v1591 = vxor.u32 %v1463, 2147483648
  %v1592 = vxor.u32 %v1472, 2147483648
  %v1593 = vxor.u32 %v1481, 2147483648
  %v1594 = vxor.u32 %v1490, 2147483648
  %v1595 = vxor.u32 %v1499, 2147483648
  %v1596 = vxor.u32 %v1508, 2147483648
  %v1597 = vxor.u32 %v1517, 2147483648
  %v1598 = vxor.u32 %v1526, 2147483648
  %v1599 = vxor.u32 %v1535, 2147483648
  %v1600 = vxor.u32 %v1544, 2147483648
  %v1601 = vxor.u32 %v1553, 2147483648
  %v1602 = vxor.u32 %v1562, 2147483648
  %v1603 = vxor.u32 %v1571, 2147483648
  %v1604 = vmul.f32 %v1572, 1.442695
  %v1605 = vpow.pop %v1604
  %v1606 = vmul.f32 %v1573, 1.442695
  %v1607 = vpow.pop %v1606
  %v1608 = vmul.f32 %v1574, 1.442695
  %v1609 = vpow.pop %v1608
  %v1610 = vmul.f32 %v1575, 1.442695
  %v1611 = vpow.pop %v1610
  %v1612 = vmul.f32 %v1576, 1.442695
  %v1613 = vpow.pop %v1612
  %v1614 = vmul.f32 %v1577, 1.442695
  %v1615 = vpow.pop %v1614
  %v1616 = vmul.f32 %v1578, 1.442695
  %v1617 = vpow.pop %v1616
  %v1618 = vmul.f32 %v1579, 1.442695
  %v1619 = vpow.pop %v1618
  %v1620 = vmul.f32 %v1580, 1.442695
  %v1621 = vpow.pop %v1620
  %v1622 = vmul.f32 %v1581, 1.442695
  %v1623 = vpow.pop %v1622
  %v1624 = vmul.f32 %v1582, 1.442695
  %v1625 = vpow.pop %v1624
  %v1626 = vmul.f32 %v1583, 1.442695
  %v1627 = vpow.pop %v1626
  %v1628 = vmul.f32 %v1584, 1.442695
  %v1629 = vpow.pop %v1628
  %v1630 = vmul.f32 %v1585, 1.442695
  %v1631 = vpow.pop %v1630
  %v1632 = vmul.f32 %v1586, 1.442695
  %v1633 = vpow.pop %v1632
  %v1634 = vmul.f32 %v1587, 1.442695
  %v1635 = vpow.pop %v1634
  %v1636 = vmul.f32 %v1588, 1.442695
  %v1637 = vpow.pop %v1636
  %v1638 = vmul.f32 %v1589, 1.442695
  %v1639 = vpow.pop %v1638
  %v1640 = vmul.f32 %v1590, 1.442695
  %v1641 = vpow.pop %v1640
  %v1642 = vmul.f32 %v1591, 1.442695
  %v1643 = vpow.pop %v1642
  %v1644 = vmul.f32 %v1592, 1.442695
  %v1645 = vpow.pop %v1644
  %v1646 = vmul.f32 %v1593, 1.442695
  %v1647 = vpow.pop %v1646
  %v1648 = vmul.f32 %v1594, 1.442695
  %v1649 = vpow.pop %v1648
  %v1650 = vmul.f32 %v1595, 1.442695
  %v1651 = vpow.pop %v1650
  %v1652 = vmul.f32 %v1596, 1.442695
  %v1653 = vpow.pop %v1652
  %v1654 = vmul.f32 %v1597, 1.442695
  %v1655 = vpow.pop %v1654
  %v1656 = vmul.f32 %v1598, 1.442695
  %v1657 = vpow.pop %v1656
  %v1658 = vmul.f32 %v1599, 1.442695
  %v1659 = vpow.pop %v1658
  %v1660 = vmul.f32 %v1600, 1.442695
  %v1661 = vpow.pop %v1660
  %v1662 = vmul.f32 %v1601, 1.442695
  %v1663 = vpow.pop %v1662
  %v1664 = vmul.f32 %v1602, 1.442695
  %v1665 = vpow.pop %v1664
  %v1666 = vmul.f32 %v1603, 1.442695
  %v1667 = vpow.pop %v1666
  %v1668 = vadd.f32 %v1605, 1.0
  %v1669 = vadd.f32 %v1607, 1.0
  %v1670 = vadd.f32 %v1609, 1.0
  %v1671 = vadd.f32 %v1611, 1.0
  %v1672 = vadd.f32 %v1613, 1.0
  %v1673 = vadd.f32 %v1615, 1.0
  %v1674 = vadd.f32 %v1617, 1.0
  %v1675 = vadd.f32 %v1619, 1.0
  %v1676 = vadd.f32 %v1621, 1.0
  %v1677 = vadd.f32 %v1623, 1.0
  %v1678 = vadd.f32 %v1625, 1.0
  %v1679 = vadd.f32 %v1627, 1.0
  %v1680 = vadd.f32 %v1629, 1.0
  %v1681 = vadd.f32 %v1631, 1.0
  %v1682 = vadd.f32 %v1633, 1.0
  %v1683 = vadd.f32 %v1635, 1.0
  %v1684 = vadd.f32 %v1637, 1.0
  %v1685 = vadd.f32 %v1639, 1.0
  %v1686 = vadd.f32 %v1641, 1.0
  %v1687 = vadd.f32 %v1643, 1.0
  %v1688 = vadd.f32 %v1645, 1.0
  %v1689 = vadd.f32 %v1647, 1.0
  %v1690 = vadd.f32 %v1649, 1.0
  %v1691 = vadd.f32 %v1651, 1.0
  %v1692 = vadd.f32 %v1653, 1.0
  %v1693 = vadd.f32 %v1655, 1.0
  %v1694 = vadd.f32 %v1657, 1.0
  %v1695 = vadd.f32 %v1659, 1.0
  %v1696 = vadd.f32 %v1661, 1.0
  %v1697 = vadd.f32 %v1663, 1.0
  %v1698 = vadd.f32 %v1665, 1.0
  %v1699 = vadd.f32 %v1667, 1.0
  %v1700 = vrcp.pop %v1668
  %v1701 = vmul.f32 1.0, %v1700
  %v1702 = vrcp.pop %v1669
  %v1703 = vmul.f32 1.0, %v1702
  %v1704 = vrcp.pop %v1670
  %v1705 = vmul.f32 1.0, %v1704
  %v1706 = vrcp.pop %v1671
  %v1707 = vmul.f32 1.0, %v1706
  %v1708 = vrcp.pop %v1672
  %v1709 = vmul.f32 1.0, %v1708
  %v1710 = vrcp.pop %v1673
  %v1711 = vmul.f32 1.0, %v1710
  %v1712 = vrcp.pop %v1674
  %v1713 = vmul.f32 1.0, %v1712
  %v1714 = vrcp.pop %v1675
  %v1715 = vmul.f32 1.0, %v1714
  %v1716 = vrcp.pop %v1676
  %v1717 = vmul.f32 1.0, %v1716
  %v1718 = vrcp.pop %v1677
  %v1719 = vmul.f32 1.0, %v1718
  %v1720 = vrcp.pop %v1678
  %v1721 = vmul.f32 1.0, %v1720
  %v1722 = vrcp.pop %v1679
  %v1723 = vmul.f32 1.0, %v1722
  %v1724 = vrcp.pop %v1680
  %v1725 = vmul.f32 1.0, %v1724
  %v1726 = vrcp.pop %v1681
  %v1727 = vmul.f32 1.0, %v1726
  %v1728 = vrcp.pop %v1682
  %v1729 = vmul.f32 1.0, %v1728
  %v1730 = vrcp.pop %v1683
  %v1731 = vmul.f32 1.0, %v1730
  %v1732 = vrcp.pop %v1684
  %v1733 = vmul.f32 1.0, %v1732
  %v1734 = vrcp.pop %v1685
  %v1735 = vmul.f32 1.0, %v1734
  %v1736 = vrcp.pop %v1686
  %v1737 = vmul.f32 1.0, %v1736
  %v1738 = vrcp.pop %v1687
  %v1739 = vmul.f32 1.0, %v1738
  %v1740 = vrcp.pop %v1688
  %v1741 = vmul.f32 1.0, %v1740
  %v1742 = vrcp.pop %v1689
  %v1743 = vmul.f32 1.0, %v1742
  %v1744 = vrcp.pop %v1690
  %v1745 = vmul.f32 1.0, %v1744
  %v1746 = vrcp.pop %v1691
  %v1747 = vmul.f32 1.0, %v1746
  %v1748 = vrcp.pop %v1692
  %v1749 = vmul.f32 1.0, %v1748
  %v1750 = vrcp.pop %v1693
  %v1751 = vmul.f32 1.0, %v1750
  %v1752 = vrcp.pop %v1694
  %v1753 = vmul.f32 1.0, %v1752
  %v1754 = vrcp.pop %v1695
  %v1755 = vmul.f32 1.0, %v1754
  %v1756 = vrcp.pop %v1696
  %v1757 = vmul.f32 1.0, %v1756
  %v1758 = vrcp.pop %v1697
  %v1759 = vmul.f32 1.0, %v1758
  %v1760 = vrcp.pop %v1698
  %v1761 = vmul.f32 1.0, %v1760
  %v1762 = vrcp.pop %v1699
  %v1763 = vmul.f32 1.0, %v1762
  %v1764 = vmul.f32 %v1028, %v1701
  %v1765 = vmul.f32 %v1029, %v1703
  %v1766 = vmul.f32 %v1030, %v1705
  %v1767 = vmul.f32 %v1031, %v1707
  %v1768 = vmul.f32 %v1032, %v1709
  %v1769 = vmul.f32 %v1033, %v1711
  %v1770 = vmul.f32 %v1034, %v1713
  %v1771 = vmul.f32 %v1035, %v1715
  %v1772 = vmul.f32 %v1036, %v1717
  %v1773 = vmul.f32 %v1037, %v1719
  %v1774 = vmul.f32 %v1038, %v1721
  %v1775 = vmul.f32 %v1039, %v1723
  %v1776 = vmul.f32 %v1040, %v1725
  %v1777 = vmul.f32 %v1041, %v1727
  %v1778 = vmul.f32 %v1042, %v1729
  %v1779 = vmul.f32 %v1043, %v1731
  %v1780 = vmul.f32 %v1044, %v1733
  %v1781 = vmul.f32 %v1045, %v1735
  %v1782 = vmul.f32 %v1046, %v1737
  %v1783 = vmul.f32 %v1047, %v1739
  %v1784 = vmul.f32 %v1048, %v1741
  %v1785 = vmul.f32 %v1049, %v1743
  %v1786 = vmul.f32 %v1050, %v1745
  %v1787 = vmul.f32 %v1051, %v1747
  %v1788 = vmul.f32 %v1052, %v1749
  %v1789 = vmul.f32 %v1053, %v1751
  %v1790 = vmul.f32 %v1054, %v1753
  %v1791 = vmul.f32 %v1055, %v1755
  %v1792 = vmul.f32 %v1056, %v1757
  %v1793 = vmul.f32 %v1057, %v1759
  %v1794 = vmul.f32 %v1058, %v1761
  %v1795 = vmul.f32 %v1059, %v1763
  %v1796 = vmul.f32 %v1060, %v1701
  %v1797 = vmul.f32 %v1061, %v1703
  %v1798 = vmul.f32 %v1062, %v1705
  %v1799 = vmul.f32 %v1063, %v1707
  %v1800 = vmul.f32 %v1064, %v1709
  %v1801 = vmul.f32 %v1065, %v1711
  %v1802 = vmul.f32 %v1066, %v1713
  %v1803 = vmul.f32 %v1067, %v1715
  %v1804 = vmul.f32 %v1068, %v1717
  %v1805 = vmul.f32 %v1069, %v1719
  %v1806 = vmul.f32 %v1070, %v1721
  %v1807 = vmul.f32 %v1071, %v1723
  %v1808 = vmul.f32 %v1072, %v1725
  %v1809 = vmul.f32 %v1073, %v1727
  %v1810 = vmul.f32 %v1074, %v1729
  %v1811 = vmul.f32 %v1075, %v1731
  %v1812 = vmul.f32 %v1076, %v1733
  %v1813 = vmul.f32 %v1077, %v1735
  %v1814 = vmul.f32 %v1078, %v1737
  %v1815 = vmul.f32 %v1079, %v1739
  %v1816 = vmul.f32 %v1080, %v1741
  %v1817 = vmul.f32 %v1081, %v1743
  %v1818 = vmul.f32 %v1082, %v1745
  %v1819 = vmul.f32 %v1083, %v1747
  %v1820 = vmul.f32 %v1084, %v1749
  %v1821 = vmul.f32 %v1085, %v1751
  %v1822 = vmul.f32 %v1086, %v1753
  %v1823 = vmul.f32 %v1087, %v1755
  %v1824 = vmul.f32 %v1088, %v1757
  %v1825 = vmul.f32 %v1089, %v1759
  %v1826 = vmul.f32 %v1090, %v1761
  %v1827 = vmul.f32 %v1091, %v1763
  %v1828 = vmul.f32 %v1092, %v1701
  %v1829 = vmul.f32 %v1093, %v1703
  %v1830 = vmul.f32 %v1094, %v1705
  %v1831 = vmul.f32 %v1095, %v1707
  %v1832 = vmul.f32 %v1096, %v1709
  %v1833 = vmul.f32 %v1097, %v1711
  %v1834 = vmul.f32 %v1098, %v1713
  %v1835 = vmul.f32 %v1099, %v1715
  %v1836 = vmul.f32 %v1100, %v1717
  %v1837 = vmul.f32 %v1101, %v1719
  %v1838 = vmul.f32 %v1102, %v1721
  %v1839 = vmul.f32 %v1103, %v1723
  %v1840 = vmul.f32 %v1104, %v1725
  %v1841 = vmul.f32 %v1105, %v1727
  %v1842 = vmul.f32 %v1106, %v1729
  %v1843 = vmul.f32 %v1107, %v1731
  %v1844 = vmul.f32 %v1108, %v1733
  %v1845 = vmul.f32 %v1109, %v1735
  %v1846 = vmul.f32 %v1110, %v1737
  %v1847 = vmul.f32 %v1111, %v1739
  %v1848 = vmul.f32 %v1112, %v1741
  %v1849 = vmul.f32 %v1113, %v1743
  %v1850 = vmul.f32 %v1114, %v1745
  %v1851 = vmul.f32 %v1115, %v1747
  %v1852 = vmul.f32 %v1116, %v1749
  %v1853 = vmul.f32 %v1117, %v1751
  %v1854 = vmul.f32 %v1118, %v1753
  %v1855 = vmul.f32 %v1119, %v1755
  %v1856 = vmul.f32 %v1120, %v1757
  %v1857 = vmul.f32 %v1121, %v1759
  %v1858 = vmul.f32 %v1122, %v1761
  %v1859 = vmul.f32 %v1123, %v1763
  %v1860 = vmul.f32 %v1124, %v1701
  %v1861 = vmul.f32 %v1125, %v1703
  %v1862 = vmul.f32 %v1126, %v1705
  %v1863 = vmul.f32 %v1127, %v1707
  %v1864 = vmul.f32 %v1128, %v1709
  %v1865 = vmul.f32 %v1129, %v1711
  %v1866 = vmul.f32 %v1130, %v1713
  %v1867 = vmul.f32 %v1131, %v1715
  %v1868 = vmul.f32 %v1132, %v1717
  %v1869 = vmul.f32 %v1133, %v1719
  %v1870 = vmul.f32 %v1134, %v1721
  %v1871 = vmul.f32 %v1135, %v1723
  %v1872 = vmul.f32 %v1136, %v1725
  %v1873 = vmul.f32 %v1137, %v1727
  %v1874 = vmul.f32 %v1138, %v1729
  %v1875 = vmul.f32 %v1139, %v1731
  %v1876 = vmul.f32 %v1140, %v1733
  %v1877 = vmul.f32 %v1141, %v1735
  %v1878 = vmul.f32 %v1142, %v1737
  %v1879 = vmul.f32 %v1143, %v1739
  %v1880 = vmul.f32 %v1144, %v1741
  %v1881 = vmul.f32 %v1145, %v1743
  %v1882 = vmul.f32 %v1146, %v1745
  %v1883 = vmul.f32 %v1147, %v1747
  %v1884 = vmul.f32 %v1148, %v1749
  %v1885 = vmul.f32 %v1149, %v1751
  %v1886 = vmul.f32 %v1150, %v1753
  %v1887 = vmul.f32 %v1151, %v1755
  %v1888 = vmul.f32 %v1152, %v1757
  %v1889 = vmul.f32 %v1153, %v1759
  %v1890 = vmul.f32 %v1154, %v1761
  %v1891 = vmul.f32 %v1155, %v1763
  %s1892 = scalar_lea.vmem %s2, 1024
  %1893 = vst [vmem:[%s1892] sm:$0xff] %v1764
  %1894 = vst [vmem:[%s1892 + $0x8] sm:$0xff] %v1765
  %1895 = vst [vmem:[%s1892 + $0x10] sm:$0xff] %v1766
  %1896 = vst [vmem:[%s1892 + $0x18] sm:$0xff] %v1767
  %1897 = vst [vmem:[%s1892 + $0x20] sm:$0xff] %v1768
  %1898 = vst [vmem:[%s1892 + $0x28] sm:$0xff] %v1769
  %1899 = vst [vmem:[%s1892 + $0x30] sm:$0xff] %v1770
  %1900 = vst [vmem:[%s1892 + $0x38] sm:$0xff] %v1771
  %1901 = vst [vmem:[%s1892 + $0x40] sm:$0xff] %v1772
  %1902 = vst [vmem:[%s1892 + $0x48] sm:$0xff] %v1773
  %1903 = vst [vmem:[%s1892 + $0x50] sm:$0xff] %v1774
  %1904 = vst [vmem:[%s1892 + $0x58] sm:$0xff] %v1775
  %1905 = vst [vmem:[%s1892 + $0x60] sm:$0xff] %v1776
  %1906 = vst [vmem:[%s1892 + $0x68] sm:$0xff] %v1777
  %1907 = vst [vmem:[%s1892 + $0x70] sm:$0xff] %v1778
  %1908 = vst [vmem:[%s1892 + $0x78] sm:$0xff] %v1779
  %1909 = vst [vmem:[%s1892 + $0x80] sm:$0xff] %v1780
  %1910 = vst [vmem:[%s1892 + $0x88] sm:$0xff] %v1781
  %1911 = vst [vmem:[%s1892 + $0x90] sm:$0xff] %v1782
  %1912 = vst [vmem:[%s1892 + $0x98] sm:$0xff] %v1783
  %1913 = vst [vmem:[%s1892 + $0xa0] sm:$0xff] %v1784
  %1914 = vst [vmem:[%s1892 + $0xa8] sm:$0xff] %v1785
  %1915 = vst [vmem:[%s1892 + $0xb0] sm:$0xff] %v1786
  %1916 = vst [vmem:[%s1892 + $0xb8] sm:$0xff] %v1787
  %1917 = vst [vmem:[%s1892 + $0xc0] sm:$0xff] %v1788
  %1918 = vst [vmem:[%s1892 + $0xc8] sm:$0xff] %v1789
  %1919 = vst [vmem:[%s1892 + $0xd0] sm:$0xff] %v1790
  %1920 = vst [vmem:[%s1892 + $0xd8] sm:$0xff] %v1791
  %1921 = vst [vmem:[%s1892 + $0xe0] sm:$0xff] %v1792
  %1922 = vst [vmem:[%s1892 + $0xe8] sm:$0xff] %v1793
  %1923 = vst [vmem:[%s1892 + $0xf0] sm:$0xff] %v1794
  %1924 = vst [vmem:[%s1892 + $0xf8] sm:$0xff] %v1795
  %1925 = vst [vmem:[%s1892 + $0x100] sm:$0xff] %v1796
  %1926 = vst [vmem:[%s1892 + $0x108] sm:$0xff] %v1797
  %1927 = vst [vmem:[%s1892 + $0x110] sm:$0xff] %v1798
  %1928 = vst [vmem:[%s1892 + $0x118] sm:$0xff] %v1799
  %1929 = vst [vmem:[%s1892 + $0x120] sm:$0xff] %v1800
  %1930 = vst [vmem:[%s1892 + $0x128] sm:$0xff] %v1801
  %1931 = vst [vmem:[%s1892 + $0x130] sm:$0xff] %v1802
  %1932 = vst [vmem:[%s1892 + $0x138] sm:$0xff] %v1803
  %1933 = vst [vmem:[%s1892 + $0x140] sm:$0xff] %v1804
  %1934 = vst [vmem:[%s1892 + $0x148] sm:$0xff] %v1805
  %1935 = vst [vmem:[%s1892 + $0x150] sm:$0xff] %v1806
  %1936 = vst [vmem:[%s1892 + $0x158] sm:$0xff] %v1807
  %1937 = vst [vmem:[%s1892 + $0x160] sm:$0xff] %v1808
  %1938 = vst [vmem:[%s1892 + $0x168] sm:$0xff] %v1809
  %1939 = vst [vmem:[%s1892 + $0x170] sm:$0xff] %v1810
  %1940 = vst [vmem:[%s1892 + $0x178] sm:$0xff] %v1811
  %1941 = vst [vmem:[%s1892 + $0x180] sm:$0xff] %v1812
  %1942 = vst [vmem:[%s1892 + $0x188] sm:$0xff] %v1813
  %1943 = vst [vmem:[%s1892 + $0x190] sm:$0xff] %v1814
  %1944 = vst [vmem:[%s1892 + $0x198] sm:$0xff] %v1815
  %1945 = vst [vmem:[%s1892 + $0x1a0] sm:$0xff] %v1816
  %1946 = vst [vmem:[%s1892 + $0x1a8] sm:$0xff] %v1817
  %1947 = vst [vmem:[%s1892 + $0x1b0] sm:$0xff] %v1818
  %1948 = vst [vmem:[%s1892 + $0x1b8] sm:$0xff] %v1819
  %1949 = vst [vmem:[%s1892 + $0x1c0] sm:$0xff] %v1820
  %1950 = vst [vmem:[%s1892 + $0x1c8] sm:$0xff] %v1821
  %1951 = vst [vmem:[%s1892 + $0x1d0] sm:$0xff] %v1822
  %1952 = vst [vmem:[%s1892 + $0x1d8] sm:$0xff] %v1823
  %1953 = vst [vmem:[%s1892 + $0x1e0] sm:$0xff] %v1824
  %1954 = vst [vmem:[%s1892 + $0x1e8] sm:$0xff] %v1825
  %1955 = vst [vmem:[%s1892 + $0x1f0] sm:$0xff] %v1826
  %1956 = vst [vmem:[%s1892 + $0x1f8] sm:$0xff] %v1827
  %1957 = vst [vmem:[%s1892 + $0x200] sm:$0xff] %v1828
  %1958 = vst [vmem:[%s1892 + $0x208] sm:$0xff] %v1829
  %1959 = vst [vmem:[%s1892 + $0x210] sm:$0xff] %v1830
  %1960 = vst [vmem:[%s1892 + $0x218] sm:$0xff] %v1831
  %1961 = vst [vmem:[%s1892 + $0x220] sm:$0xff] %v1832
  %1962 = vst [vmem:[%s1892 + $0x228] sm:$0xff] %v1833
  %1963 = vst [vmem:[%s1892 + $0x230] sm:$0xff] %v1834
  %1964 = vst [vmem:[%s1892 + $0x238] sm:$0xff] %v1835
  %1965 = vst [vmem:[%s1892 + $0x240] sm:$0xff] %v1836
  %1966 = vst [vmem:[%s1892 + $0x248] sm:$0xff] %v1837
  %1967 = vst [vmem:[%s1892 + $0x250] sm:$0xff] %v1838
  %1968 = vst [vmem:[%s1892 + $0x258] sm:$0xff] %v1839
  %1969 = vst [vmem:[%s1892 + $0x260] sm:$0xff] %v1840
  %1970 = vst [vmem:[%s1892 + $0x268] sm:$0xff] %v1841
  %1971 = vst [vmem:[%s1892 + $0x270] sm:$0xff] %v1842
  %1972 = vst [vmem:[%s1892 + $0x278] sm:$0xff] %v1843
  %1973 = vst [vmem:[%s1892 + $0x280] sm:$0xff] %v1844
  %1974 = vst [vmem:[%s1892 + $0x288] sm:$0xff] %v1845
  %1975 = vst [vmem:[%s1892 + $0x290] sm:$0xff] %v1846
  %1976 = vst [vmem:[%s1892 + $0x298] sm:$0xff] %v1847
  %1977 = vst [vmem:[%s1892 + $0x2a0] sm:$0xff] %v1848
  %1978 = vst [vmem:[%s1892 + $0x2a8] sm:$0xff] %v1849
  %1979 = vst [vmem:[%s1892 + $0x2b0] sm:$0xff] %v1850
  %1980 = vst [vmem:[%s1892 + $0x2b8] sm:$0xff] %v1851
  %1981 = vst [vmem:[%s1892 + $0x2c0] sm:$0xff] %v1852
  %1982 = vst [vmem:[%s1892 + $0x2c8] sm:$0xff] %v1853
  %1983 = vst [vmem:[%s1892 + $0x2d0] sm:$0xff] %v1854
  %1984 = vst [vmem:[%s1892 + $0x2d8] sm:$0xff] %v1855
  %1985 = vst [vmem:[%s1892 + $0x2e0] sm:$0xff] %v1856
  %1986 = vst [vmem:[%s1892 + $0x2e8] sm:$0xff] %v1857
  %1987 = vst [vmem:[%s1892 + $0x2f0] sm:$0xff] %v1858
  %1988 = vst [vmem:[%s1892 + $0x2f8] sm:$0xff] %v1859
  %1989 = vst [vmem:[%s1892 + $0x300] sm:$0xff] %v1860
  %1990 = vst [vmem:[%s1892 + $0x308] sm:$0xff] %v1861
  %1991 = vst [vmem:[%s1892 + $0x310] sm:$0xff] %v1862
  %1992 = vst [vmem:[%s1892 + $0x318] sm:$0xff] %v1863
  %1993 = vst [vmem:[%s1892 + $0x320] sm:$0xff] %v1864
  %1994 = vst [vmem:[%s1892 + $0x328] sm:$0xff] %v1865
  %1995 = vst [vmem:[%s1892 + $0x330] sm:$0xff] %v1866
  %1996 = vst [vmem:[%s1892 + $0x338] sm:$0xff] %v1867
  %1997 = vst [vmem:[%s1892 + $0x340] sm:$0xff] %v1868
  %1998 = vst [vmem:[%s1892 + $0x348] sm:$0xff] %v1869
  %1999 = vst [vmem:[%s1892 + $0x350] sm:$0xff] %v1870
  %2000 = vst [vmem:[%s1892 + $0x358] sm:$0xff] %v1871
  %2001 = vst [vmem:[%s1892 + $0x360] sm:$0xff] %v1872
  %2002 = vst [vmem:[%s1892 + $0x368] sm:$0xff] %v1873
  %2003 = vst [vmem:[%s1892 + $0x370] sm:$0xff] %v1874
  %2004 = vst [vmem:[%s1892 + $0x378] sm:$0xff] %v1875
  %2005 = vst [vmem:[%s1892 + $0x380] sm:$0xff] %v1876
  %2006 = vst [vmem:[%s1892 + $0x388] sm:$0xff] %v1877
  %2007 = vst [vmem:[%s1892 + $0x390] sm:$0xff] %v1878
  %2008 = vst [vmem:[%s1892 + $0x398] sm:$0xff] %v1879
  %2009 = vst [vmem:[%s1892 + $0x3a0] sm:$0xff] %v1880
  %2010 = vst [vmem:[%s1892 + $0x3a8] sm:$0xff] %v1881
  %2011 = vst [vmem:[%s1892 + $0x3b0] sm:$0xff] %v1882
  %2012 = vst [vmem:[%s1892 + $0x3b8] sm:$0xff] %v1883
  %2013 = vst [vmem:[%s1892 + $0x3c0] sm:$0xff] %v1884
  %2014 = vst [vmem:[%s1892 + $0x3c8] sm:$0xff] %v1885
  %2015 = vst [vmem:[%s1892 + $0x3d0] sm:$0xff] %v1886
  %2016 = vst [vmem:[%s1892 + $0x3d8] sm:$0xff] %v1887
  %2017 = vst [vmem:[%s1892 + $0x3e0] sm:$0xff] %v1888
  %2018 = vst [vmem:[%s1892 + $0x3e8] sm:$0xff] %v1889
  %2019 = vst [vmem:[%s1892 + $0x3f0] sm:$0xff] %v1890
  %2020 = vst [vmem:[%s1892 + $0x3f8] sm:$0xff] %v1891
  // Predicated region
  $region10: #{spatial_weighting_v2.1} parent=0 // pred_check
    _
  $region11: #{spatial_weighting_v2.1} parent=0 // pred_check_branch
    %2022 = sbr.rel (0) target = $region13
  $region12: #{spatial_weighting_v2.1} parent=0 // pred_region
    _
  $region13: #{spatial_weighting_v2.1} parent=0 // pred_fallthru
    _
  // Predicated region
  $region14: #{spatial_weighting_v2.1} parent=0 // pred_check
    _
  $region15: #{spatial_weighting_v2.1} parent=0 // pred_check_branch
    %2024 = sbr.rel (0) target = $region17
  $region16: #{spatial_weighting_v2.1} parent=0 // pred_region
    _
  $region17: #{spatial_weighting_v2.1} parent=0 // pred_fallthru
    _

</llo_original>
